<compile_context>
chip_gen: v6e
topology: v6e:2x2x1
jax: 0.10.0
libtpu: 0.0.40
codegen_flags: <defaults>
</compile_context>

<pallas_src>
import jax
import jax.numpy as jnp
from jax import lax
from jax.experimental import pallas as pl
from jax.experimental.pallas import tpu as pltpu


def lstm_kernel(tmax_ref, tmin_ref, tmean_ref, wih_ref, bias_ref, whh_ref,
                h0_ref, c0_ref, out_ref):
    """Fused input projection + T-step LSTM recurrence; writes h_T.

    tmax/tmin/tmean : (B, T)  f32   raw per-day features
    wih_ref         : (3, 4H) f32   W_ih.T (one row per input feature)
    bias_ref        : (1, 4H) f32   b_ih + b_hh
    whh_ref         : (H, 4H) bf16  W_hh.T (bf16 -> single MXU pass)
    h0_ref, c0_ref  : (B, H)  f32   initial hidden / cell state
    out_ref         : (B, H)  f32   final hidden state h_T
    """
    B, T = tmax_ref.shape
    H = h0_ref.shape[1]

    # Loop-invariant loads hoisted once (JAX does not CSE broadcasts).
    w0 = wih_ref[0:1, :]          # (1, 4H)
    w1 = wih_ref[1:2, :]
    w2 = wih_ref[2:3, :]
    bias = bias_ref[...]          # (1, 4H), broadcasts over B
    whh = whh_ref[...]            # (H, 4H) bf16, resident across all steps

    h = h0_ref[...]
    c = c0_ref[...]

    # T is small and static: a plain Python loop == fully unrolled recurrence,
    # letting the LLO scheduler interleave MXU / EUP / VPU work across steps.
    for t in range(T):
        # In-kernel input projection: K=3 -> three VPU FMAs, no HBM round-trip.
        x_t = (tmax_ref[:, t:t + 1] * w0
               + tmin_ref[:, t:t + 1] * w1
               + tmean_ref[:, t:t + 1] * w2
               + bias)                                          # (B, 4H) f32
        # Recurrent matmul: bf16 operands (MXU-native), f32 accumulation.
        gates = x_t + jnp.dot(h.astype(jnp.bfloat16), whh,
                              preferred_element_type=jnp.float32)
        # PyTorch gate order i, f, g, o.  i|f contiguous -> one wide sigmoid.
        i_f = jax.nn.sigmoid(gates[:, 0:2 * H])
        i = i_f[:, 0:H]
        f = i_f[:, H:2 * H]
        g = jnp.tanh(gates[:, 2 * H:3 * H])
        o = jax.nn.sigmoid(gates[:, 3 * H:4 * H])
        c = f * c + i * g
        h = o * jnp.tanh(c)

    out_ref[...] = h


def _vmem_spec():
    return pl.BlockSpec(memory_space=pltpu.MemorySpace.VMEM)


@jax.jit
def temperature_model_forward(t_max, t_min, t_mean, w_ih, w_hh, b_ih, b_hh,
                              h0, c0):
    """Mirrors TemperatureModel.forward (h0/c0 passed explicitly for determinism)."""
    B, T = t_max.shape
    H = w_hh.shape[1]

    w_ih_t = w_ih.T.astype(jnp.float32)                     # (3, 4H)
    bias = (b_ih + b_hh).reshape(1, 4 * H).astype(jnp.float32)
    w_hh_t = w_hh.T.astype(jnp.bfloat16)                    # (H, 4H) bf16

    args = (t_max.astype(jnp.float32), t_min.astype(jnp.float32),
            t_mean.astype(jnp.float32), w_ih_t, bias, w_hh_t,
            h0.astype(jnp.float32), c0.astype(jnp.float32))

    # Advisory cost hint for XLA's scheduler around the custom call.
    flops = T * (2 * B * H * 4 * H + 8 * B * 4 * H)
    transcendentals = T * 5 * B * H
    bytes_accessed = sum(int(a.size) * a.dtype.itemsize for a in args) + B * H * 4

    out = pl.pallas_call(
        lstm_kernel,
        out_shape=jax.ShapeDtypeStruct((B, H), jnp.float32),
        in_specs=[_vmem_spec() for _ in args],
        out_specs=_vmem_spec(),
        cost_estimate=pl.CostEstimate(flops=flops,
                                      transcendentals=transcendentals,
                                      bytes_accessed=bytes_accessed),
    )(*args)
    # xss[:, -1, :].squeeze()  (no-op squeeze for B > 1)
    return jnp.squeeze(out)


def lstm_ref(t_max, t_min, t_mean, w_ih, w_hh, b_ih, b_hh, h0, c0):
    """Pure-JAX f32 reference (same math as torch.nn.LSTM forward, last hidden)."""
    xs = jnp.stack([t_max, t_min, t_mean], axis=-1)
    H = h0.shape[1]

    def step(carry, x_t):
        h, c = carry
        gates = x_t @ w_ih.T + b_ih + h @ w_hh.T + b_hh
        i = jax.nn.sigmoid(gates[:, 0 * H:1 * H])
        f = jax.nn.sigmoid(gates[:, 1 * H:2 * H])
        g = jnp.tanh(gates[:, 2 * H:3 * H])
        o = jax.nn.sigmoid(gates[:, 3 * H:4 * H])
        c = f * c + i * g
        h = o * jnp.tanh(c)
        return (h, c), None

    (h, _), _ = lax.scan(step, (h0, c0), jnp.transpose(xs, (1, 0, 2)))
    return jnp.squeeze(h)


if __name__ == "__main__":
    B, T, H, K = 8, 8, 128, 3  # batch, seq, hidden_size (module default), input_size

    key = jax.random.PRNGKey(0)
    ks = jax.random.split(key, 9)

    # Inputs: per-day temperature sequences (B, T)
    t_max = jax.random.normal(ks[0], (B, T), jnp.float32)
    t_min = jax.random.normal(ks[1], (B, T), jnp.float32)
    t_mean = jax.random.normal(ks[2], (B, T), jnp.float32)

    # LSTM parameters, PyTorch-style init: U(-1/sqrt(H), 1/sqrt(H))
    bound = 1.0 / jnp.sqrt(jnp.float32(H))
    w_ih = jax.random.uniform(ks[3], (4 * H, K), jnp.float32, -bound, bound)
    w_hh = jax.random.uniform(ks[4], (4 * H, H), jnp.float32, -bound, bound)
    b_ih = jax.random.uniform(ks[5], (4 * H,), jnp.float32, -bound, bound)
    b_hh = jax.random.uniform(ks[6], (4 * H,), jnp.float32, -bound, bound)

    # h0, c0 ~ randn (the torch module draws these at forward time; made
    # deterministic here by injecting them).
    h0 = jax.random.normal(ks[7], (B, H), jnp.float32)
    c0 = jax.random.normal(ks[8], (B, H), jnp.float32)

    out = temperature_model_forward(t_max, t_min, t_mean,
                                    w_ih, w_hh, b_ih, b_hh, h0, c0)
    out = jax.block_until_ready(out)

    ref = lstm_ref(t_max, t_min, t_mean, w_ih, w_hh, b_ih, b_hh, h0, c0)
    ref = jax.block_until_ready(ref)

    assert out.shape == (B, H), out.shape
    # bf16 recurrent matmul over 8 serial steps -> loosen tolerance vs f32 ref.
    err = float(jnp.max(jnp.abs(out - ref)))
    assert err < 2e-2, err
    print("KERNEL_OK")
</pallas_src>

<mosaic_0001>
module attributes {stable_mosaic.version = 11 : i64} {
  func.func @lstm_kernel(%arg0: memref<8x8xf32, #tpu.memory_space<vmem>>, %arg1: memref<8x8xf32, #tpu.memory_space<vmem>>, %arg2: memref<8x8xf32, #tpu.memory_space<vmem>>, %arg3: memref<3x512xf32, #tpu.memory_space<vmem>>, %arg4: memref<1x512xf32, #tpu.memory_space<vmem>>, %arg5: memref<128x512xbf16, #tpu.memory_space<vmem>>, %arg6: memref<8x128xf32, #tpu.memory_space<vmem>>, %arg7: memref<8x128xf32, #tpu.memory_space<vmem>>, %arg8: memref<8x128xf32, #tpu.memory_space<vmem>>) attributes {dimension_semantics = [], scalar_prefetch = 0 : i64, scratch_operands = 0 : i64, tpu.core_type = #tpu.core_type<tc>} {
    %c0 = arith.constant 0 : index
    %c0_0 = arith.constant 0 : index
    %0 = vector.load %arg3[%c0, %c0_0] : memref<3x512xf32, #tpu.memory_space<vmem>>, vector<1x512xf32>
    %c1 = arith.constant 1 : index
    %c0_1 = arith.constant 0 : index
    %1 = vector.load %arg3[%c1, %c0_1] : memref<3x512xf32, #tpu.memory_space<vmem>>, vector<1x512xf32>
    %c2 = arith.constant 2 : index
    %c0_2 = arith.constant 0 : index
    %2 = vector.load %arg3[%c2, %c0_2] : memref<3x512xf32, #tpu.memory_space<vmem>>, vector<1x512xf32>
    %c0_3 = arith.constant 0 : index
    %c0_4 = arith.constant 0 : index
    %3 = vector.load %arg4[%c0_3, %c0_4] : memref<1x512xf32, #tpu.memory_space<vmem>>, vector<1x512xf32>
    %c0_5 = arith.constant 0 : index
    %c0_6 = arith.constant 0 : index
    %4 = vector.load %arg5[%c0_5, %c0_6] : memref<128x512xbf16, #tpu.memory_space<vmem>>, vector<128x512xbf16>
    %c0_7 = arith.constant 0 : index
    %c0_8 = arith.constant 0 : index
    %5 = vector.load %arg6[%c0_7, %c0_8] : memref<8x128xf32, #tpu.memory_space<vmem>>, vector<8x128xf32>
    %c0_9 = arith.constant 0 : index
    %c0_10 = arith.constant 0 : index
    %6 = vector.load %arg7[%c0_9, %c0_10] : memref<8x128xf32, #tpu.memory_space<vmem>>, vector<8x128xf32>
    %c0_11 = arith.constant 0 : index
    %c0_12 = arith.constant 0 : index
    %7 = vector.load %arg0[%c0_11, %c0_12] : memref<8x8xf32, #tpu.memory_space<vmem>>, vector<8x1xf32>
    %8 = vector.broadcast %7 : vector<8x1xf32> to vector<8x512xf32>
    %9 = vector.broadcast %0 : vector<1x512xf32> to vector<8x512xf32>
    %10 = arith.mulf %8, %9 : vector<8x512xf32>
    %c0_13 = arith.constant 0 : index
    %c0_14 = arith.constant 0 : index
    %11 = vector.load %arg1[%c0_13, %c0_14] : memref<8x8xf32, #tpu.memory_space<vmem>>, vector<8x1xf32>
    %12 = vector.broadcast %11 : vector<8x1xf32> to vector<8x512xf32>
    %13 = vector.broadcast %1 : vector<1x512xf32> to vector<8x512xf32>
    %14 = arith.mulf %12, %13 : vector<8x512xf32>
    %15 = arith.addf %10, %14 : vector<8x512xf32>
    %c0_15 = arith.constant 0 : index
    %c0_16 = arith.constant 0 : index
    %16 = vector.load %arg2[%c0_15, %c0_16] : memref<8x8xf32, #tpu.memory_space<vmem>>, vector<8x1xf32>
    %17 = vector.broadcast %16 : vector<8x1xf32> to vector<8x512xf32>
    %18 = vector.broadcast %2 : vector<1x512xf32> to vector<8x512xf32>
    %19 = arith.mulf %17, %18 : vector<8x512xf32>
    %20 = arith.addf %15, %19 : vector<8x512xf32>
    %21 = vector.broadcast %3 : vector<1x512xf32> to vector<8x512xf32>
    %22 = arith.addf %20, %21 : vector<8x512xf32>
    %23 = arith.truncf %5 : vector<8x128xf32> to vector<8x128xbf16>
    %cst = arith.constant dense<0.000000e+00> : vector<8x512xf32>
    %24 = tpu.matmul %23, %4, %cst {dimension_numbers = #tpu.dot_dimension_numbers<[1], [0], [0], [1], [0, 0, 1, 1], [], []>} : vector<8x128xbf16>, vector<128x512xbf16>, vector<8x512xf32> -> vector<8x512xf32>
    %25 = arith.addf %22, %24 : vector<8x512xf32>
    %26 = vector.extract_strided_slice %25 {offsets = [0, 0], sizes = [8, 256], strides = [1, 1]} : vector<8x512xf32> to vector<8x256xf32>
    %27 = arith.negf %26 : vector<8x256xf32>
    %28 = math.exp %27 : vector<8x256xf32>
    %cst_17 = arith.constant 1.000000e+00 : f32
    %29 = vector.broadcast %cst_17 : f32 to vector<8x256xf32>
    %30 = arith.addf %29, %28 : vector<8x256xf32>
    %31 = arith.divf %29, %30 : vector<8x256xf32>
    %32 = vector.extract_strided_slice %31 {offsets = [0, 0], sizes = [8, 128], strides = [1, 1]} : vector<8x256xf32> to vector<8x128xf32>
    %33 = vector.extract_strided_slice %31 {offsets = [0, 128], sizes = [8, 128], strides = [1, 1]} : vector<8x256xf32> to vector<8x128xf32>
    %34 = vector.extract_strided_slice %25 {offsets = [0, 256], sizes = [8, 128], strides = [1, 1]} : vector<8x512xf32> to vector<8x128xf32>
    %35 = math.tanh %34 : vector<8x128xf32>
    %36 = vector.extract_strided_slice %25 {offsets = [0, 384], sizes = [8, 128], strides = [1, 1]} : vector<8x512xf32> to vector<8x128xf32>
    %37 = arith.negf %36 : vector<8x128xf32>
    %38 = math.exp %37 : vector<8x128xf32>
    %cst_18 = arith.constant 1.000000e+00 : f32
    %39 = vector.broadcast %cst_18 : f32 to vector<8x128xf32>
    %40 = arith.addf %39, %38 : vector<8x128xf32>
    %41 = arith.divf %39, %40 : vector<8x128xf32>
    %42 = arith.mulf %33, %6 : vector<8x128xf32>
    %43 = arith.mulf %32, %35 : vector<8x128xf32>
    %44 = arith.addf %42, %43 : vector<8x128xf32>
    %45 = math.tanh %44 : vector<8x128xf32>
    %46 = arith.mulf %41, %45 : vector<8x128xf32>
    %c0_19 = arith.constant 0 : index
    %c1_20 = arith.constant 1 : index
    %47 = vector.load %arg0[%c0_19, %c1_20] : memref<8x8xf32, #tpu.memory_space<vmem>>, vector<8x1xf32>
    %48 = vector.broadcast %47 : vector<8x1xf32> to vector<8x512xf32>
    %49 = vector.broadcast %0 : vector<1x512xf32> to vector<8x512xf32>
    %50 = arith.mulf %48, %49 : vector<8x512xf32>
    %c0_21 = arith.constant 0 : index
    %c1_22 = arith.constant 1 : index
    %51 = vector.load %arg1[%c0_21, %c1_22] : memref<8x8xf32, #tpu.memory_space<vmem>>, vector<8x1xf32>
    %52 = vector.broadcast %51 : vector<8x1xf32> to vector<8x512xf32>
    %53 = vector.broadcast %1 : vector<1x512xf32> to vector<8x512xf32>
    %54 = arith.mulf %52, %53 : vector<8x512xf32>
    %55 = arith.addf %50, %54 : vector<8x512xf32>
    %c0_23 = arith.constant 0 : index
    %c1_24 = arith.constant 1 : index
    %56 = vector.load %arg2[%c0_23, %c1_24] : memref<8x8xf32, #tpu.memory_space<vmem>>, vector<8x1xf32>
    %57 = vector.broadcast %56 : vector<8x1xf32> to vector<8x512xf32>
    %58 = vector.broadcast %2 : vector<1x512xf32> to vector<8x512xf32>
    %59 = arith.mulf %57, %58 : vector<8x512xf32>
    %60 = arith.addf %55, %59 : vector<8x512xf32>
    %61 = vector.broadcast %3 : vector<1x512xf32> to vector<8x512xf32>
    %62 = arith.addf %60, %61 : vector<8x512xf32>
    %63 = arith.truncf %46 : vector<8x128xf32> to vector<8x128xbf16>
    %cst_25 = arith.constant dense<0.000000e+00> : vector<8x512xf32>
    %64 = tpu.matmul %63, %4, %cst_25 {dimension_numbers = #tpu.dot_dimension_numbers<[1], [0], [0], [1], [0, 0, 1, 1], [], []>} : vector<8x128xbf16>, vector<128x512xbf16>, vector<8x512xf32> -> vector<8x512xf32>
    %65 = arith.addf %62, %64 : vector<8x512xf32>
    %66 = vector.extract_strided_slice %65 {offsets = [0, 0], sizes = [8, 256], strides = [1, 1]} : vector<8x512xf32> to vector<8x256xf32>
    %67 = arith.negf %66 : vector<8x256xf32>
    %68 = math.exp %67 : vector<8x256xf32>
    %cst_26 = arith.constant 1.000000e+00 : f32
    %69 = vector.broadcast %cst_26 : f32 to vector<8x256xf32>
    %70 = arith.addf %69, %68 : vector<8x256xf32>
    %71 = arith.divf %69, %70 : vector<8x256xf32>
    %72 = vector.extract_strided_slice %71 {offsets = [0, 0], sizes = [8, 128], strides = [1, 1]} : vector<8x256xf32> to vector<8x128xf32>
    %73 = vector.extract_strided_slice %71 {offsets = [0, 128], sizes = [8, 128], strides = [1, 1]} : vector<8x256xf32> to vector<8x128xf32>
    %74 = vector.extract_strided_slice %65 {offsets = [0, 256], sizes = [8, 128], strides = [1, 1]} : vector<8x512xf32> to vector<8x128xf32>
    %75 = math.tanh %74 : vector<8x128xf32>
    %76 = vector.extract_strided_slice %65 {offsets = [0, 384], sizes = [8, 128], strides = [1, 1]} : vector<8x512xf32> to vector<8x128xf32>
    %77 = arith.negf %76 : vector<8x128xf32>
    %78 = math.exp %77 : vector<8x128xf32>
    %cst_27 = arith.constant 1.000000e+00 : f32
    %79 = vector.broadcast %cst_27 : f32 to vector<8x128xf32>
    %80 = arith.addf %79, %78 : vector<8x128xf32>
    %81 = arith.divf %79, %80 : vector<8x128xf32>
    %82 = arith.mulf %73, %44 : vector<8x128xf32>
    %83 = arith.mulf %72, %75 : vector<8x128xf32>
    %84 = arith.addf %82, %83 : vector<8x128xf32>
    %85 = math.tanh %84 : vector<8x128xf32>
    %86 = arith.mulf %81, %85 : vector<8x128xf32>
    %c0_28 = arith.constant 0 : index
    %c2_29 = arith.constant 2 : index
    %87 = vector.load %arg0[%c0_28, %c2_29] : memref<8x8xf32, #tpu.memory_space<vmem>>, vector<8x1xf32>
    %88 = vector.broadcast %87 : vector<8x1xf32> to vector<8x512xf32>
    %89 = vector.broadcast %0 : vector<1x512xf32> to vector<8x512xf32>
    %90 = arith.mulf %88, %89 : vector<8x512xf32>
    %c0_30 = arith.constant 0 : index
    %c2_31 = arith.constant 2 : index
    %91 = vector.load %arg1[%c0_30, %c2_31] : memref<8x8xf32, #tpu.memory_space<vmem>>, vector<8x1xf32>
    %92 = vector.broadcast %91 : vector<8x1xf32> to vector<8x512xf32>
    %93 = vector.broadcast %1 : vector<1x512xf32> to vector<8x512xf32>
    %94 = arith.mulf %92, %93 : vector<8x512xf32>
    %95 = arith.addf %90, %94 : vector<8x512xf32>
    %c0_32 = arith.constant 0 : index
    %c2_33 = arith.constant 2 : index
    %96 = vector.load %arg2[%c0_32, %c2_33] : memref<8x8xf32, #tpu.memory_space<vmem>>, vector<8x1xf32>
    %97 = vector.broadcast %96 : vector<8x1xf32> to vector<8x512xf32>
    %98 = vector.broadcast %2 : vector<1x512xf32> to vector<8x512xf32>
    %99 = arith.mulf %97, %98 : vector<8x512xf32>
    %100 = arith.addf %95, %99 : vector<8x512xf32>
    %101 = vector.broadcast %3 : vector<1x512xf32> to vector<8x512xf32>
    %102 = arith.addf %100, %101 : vector<8x512xf32>
    %103 = arith.truncf %86 : vector<8x128xf32> to vector<8x128xbf16>
    %cst_34 = arith.constant dense<0.000000e+00> : vector<8x512xf32>
    %104 = tpu.matmul %103, %4, %cst_34 {dimension_numbers = #tpu.dot_dimension_numbers<[1], [0], [0], [1], [0, 0, 1, 1], [], []>} : vector<8x128xbf16>, vector<128x512xbf16>, vector<8x512xf32> -> vector<8x512xf32>
    %105 = arith.addf %102, %104 : vector<8x512xf32>
    %106 = vector.extract_strided_slice %105 {offsets = [0, 0], sizes = [8, 256], strides = [1, 1]} : vector<8x512xf32> to vector<8x256xf32>
    %107 = arith.negf %106 : vector<8x256xf32>
    %108 = math.exp %107 : vector<8x256xf32>
    %cst_35 = arith.constant 1.000000e+00 : f32
    %109 = vector.broadcast %cst_35 : f32 to vector<8x256xf32>
    %110 = arith.addf %109, %108 : vector<8x256xf32>
    %111 = arith.divf %109, %110 : vector<8x256xf32>
    %112 = vector.extract_strided_slice %111 {offsets = [0, 0], sizes = [8, 128], strides = [1, 1]} : vector<8x256xf32> to vector<8x128xf32>
    %113 = vector.extract_strided_slice %111 {offsets = [0, 128], sizes = [8, 128], strides = [1, 1]} : vector<8x256xf32> to vector<8x128xf32>
    %114 = vector.extract_strided_slice %105 {offsets = [0, 256], sizes = [8, 128], strides = [1, 1]} : vector<8x512xf32> to vector<8x128xf32>
    %115 = math.tanh %114 : vector<8x128xf32>
    %116 = vector.extract_strided_slice %105 {offsets = [0, 384], sizes = [8, 128], strides = [1, 1]} : vector<8x512xf32> to vector<8x128xf32>
    %117 = arith.negf %116 : vector<8x128xf32>
    %118 = math.exp %117 : vector<8x128xf32>
    %cst_36 = arith.constant 1.000000e+00 : f32
    %119 = vector.broadcast %cst_36 : f32 to vector<8x128xf32>
    %120 = arith.addf %119, %118 : vector<8x128xf32>
    %121 = arith.divf %119, %120 : vector<8x128xf32>
    %122 = arith.mulf %113, %84 : vector<8x128xf32>
    %123 = arith.mulf %112, %115 : vector<8x128xf32>
    %124 = arith.addf %122, %123 : vector<8x128xf32>
    %125 = math.tanh %124 : vector<8x128xf32>
    %126 = arith.mulf %121, %125 : vector<8x128xf32>
    %c0_37 = arith.constant 0 : index
    %c3 = arith.constant 3 : index
    %127 = vector.load %arg0[%c0_37, %c3] : memref<8x8xf32, #tpu.memory_space<vmem>>, vector<8x1xf32>
    %128 = vector.broadcast %127 : vector<8x1xf32> to vector<8x512xf32>
    %129 = vector.broadcast %0 : vector<1x512xf32> to vector<8x512xf32>
    %130 = arith.mulf %128, %129 : vector<8x512xf32>
    %c0_38 = arith.constant 0 : index
    %c3_39 = arith.constant 3 : index
    %131 = vector.load %arg1[%c0_38, %c3_39] : memref<8x8xf32, #tpu.memory_space<vmem>>, vector<8x1xf32>
    %132 = vector.broadcast %131 : vector<8x1xf32> to vector<8x512xf32>
    %133 = vector.broadcast %1 : vector<1x512xf32> to vector<8x512xf32>
    %134 = arith.mulf %132, %133 : vector<8x512xf32>
    %135 = arith.addf %130, %134 : vector<8x512xf32>
    %c0_40 = arith.constant 0 : index
    %c3_41 = arith.constant 3 : index
    %136 = vector.load %arg2[%c0_40, %c3_41] : memref<8x8xf32, #tpu.memory_space<vmem>>, vector<8x1xf32>
    %137 = vector.broadcast %136 : vector<8x1xf32> to vector<8x512xf32>
    %138 = vector.broadcast %2 : vector<1x512xf32> to vector<8x512xf32>
    %139 = arith.mulf %137, %138 : vector<8x512xf32>
    %140 = arith.addf %135, %139 : vector<8x512xf32>
    %141 = vector.broadcast %3 : vector<1x512xf32> to vector<8x512xf32>
    %142 = arith.addf %140, %141 : vector<8x512xf32>
    %143 = arith.truncf %126 : vector<8x128xf32> to vector<8x128xbf16>
    %cst_42 = arith.constant dense<0.000000e+00> : vector<8x512xf32>
    %144 = tpu.matmul %143, %4, %cst_42 {dimension_numbers = #tpu.dot_dimension_numbers<[1], [0], [0], [1], [0, 0, 1, 1], [], []>} : vector<8x128xbf16>, vector<128x512xbf16>, vector<8x512xf32> -> vector<8x512xf32>
    %145 = arith.addf %142, %144 : vector<8x512xf32>
    %146 = vector.extract_strided_slice %145 {offsets = [0, 0], sizes = [8, 256], strides = [1, 1]} : vector<8x512xf32> to vector<8x256xf32>
    %147 = arith.negf %146 : vector<8x256xf32>
    %148 = math.exp %147 : vector<8x256xf32>
    %cst_43 = arith.constant 1.000000e+00 : f32
    %149 = vector.broadcast %cst_43 : f32 to vector<8x256xf32>
    %150 = arith.addf %149, %148 : vector<8x256xf32>
    %151 = arith.divf %149, %150 : vector<8x256xf32>
    %152 = vector.extract_strided_slice %151 {offsets = [0, 0], sizes = [8, 128], strides = [1, 1]} : vector<8x256xf32> to vector<8x128xf32>
    %153 = vector.extract_strided_slice %151 {offsets = [0, 128], sizes = [8, 128], strides = [1, 1]} : vector<8x256xf32> to vector<8x128xf32>
    %154 = vector.extract_strided_slice %145 {offsets = [0, 256], sizes = [8, 128], strides = [1, 1]} : vector<8x512xf32> to vector<8x128xf32>
    %155 = math.tanh %154 : vector<8x128xf32>
    %156 = vector.extract_strided_slice %145 {offsets = [0, 384], sizes = [8, 128], strides = [1, 1]} : vector<8x512xf32> to vector<8x128xf32>
    %157 = arith.negf %156 : vector<8x128xf32>
    %158 = math.exp %157 : vector<8x128xf32>
    %cst_44 = arith.constant 1.000000e+00 : f32
    %159 = vector.broadcast %cst_44 : f32 to vector<8x128xf32>
    %160 = arith.addf %159, %158 : vector<8x128xf32>
    %161 = arith.divf %159, %160 : vector<8x128xf32>
    %162 = arith.mulf %153, %124 : vector<8x128xf32>
    %163 = arith.mulf %152, %155 : vector<8x128xf32>
    %164 = arith.addf %162, %163 : vector<8x128xf32>
    %165 = math.tanh %164 : vector<8x128xf32>
    %166 = arith.mulf %161, %165 : vector<8x128xf32>
    %c0_45 = arith.constant 0 : index
    %c4 = arith.constant 4 : index
    %167 = vector.load %arg0[%c0_45, %c4] : memref<8x8xf32, #tpu.memory_space<vmem>>, vector<8x1xf32>
    %168 = vector.broadcast %167 : vector<8x1xf32> to vector<8x512xf32>
    %169 = vector.broadcast %0 : vector<1x512xf32> to vector<8x512xf32>
    %170 = arith.mulf %168, %169 : vector<8x512xf32>
    %c0_46 = arith.constant 0 : index
    %c4_47 = arith.constant 4 : index
    %171 = vector.load %arg1[%c0_46, %c4_47] : memref<8x8xf32, #tpu.memory_space<vmem>>, vector<8x1xf32>
    %172 = vector.broadcast %171 : vector<8x1xf32> to vector<8x512xf32>
    %173 = vector.broadcast %1 : vector<1x512xf32> to vector<8x512xf32>
    %174 = arith.mulf %172, %173 : vector<8x512xf32>
    %175 = arith.addf %170, %174 : vector<8x512xf32>
    %c0_48 = arith.constant 0 : index
    %c4_49 = arith.constant 4 : index
    %176 = vector.load %arg2[%c0_48, %c4_49] : memref<8x8xf32, #tpu.memory_space<vmem>>, vector<8x1xf32>
    %177 = vector.broadcast %176 : vector<8x1xf32> to vector<8x512xf32>
    %178 = vector.broadcast %2 : vector<1x512xf32> to vector<8x512xf32>
    %179 = arith.mulf %177, %178 : vector<8x512xf32>
    %180 = arith.addf %175, %179 : vector<8x512xf32>
    %181 = vector.broadcast %3 : vector<1x512xf32> to vector<8x512xf32>
    %182 = arith.addf %180, %181 : vector<8x512xf32>
    %183 = arith.truncf %166 : vector<8x128xf32> to vector<8x128xbf16>
    %cst_50 = arith.constant dense<0.000000e+00> : vector<8x512xf32>
    %184 = tpu.matmul %183, %4, %cst_50 {dimension_numbers = #tpu.dot_dimension_numbers<[1], [0], [0], [1], [0, 0, 1, 1], [], []>} : vector<8x128xbf16>, vector<128x512xbf16>, vector<8x512xf32> -> vector<8x512xf32>
    %185 = arith.addf %182, %184 : vector<8x512xf32>
    %186 = vector.extract_strided_slice %185 {offsets = [0, 0], sizes = [8, 256], strides = [1, 1]} : vector<8x512xf32> to vector<8x256xf32>
    %187 = arith.negf %186 : vector<8x256xf32>
    %188 = math.exp %187 : vector<8x256xf32>
    %cst_51 = arith.constant 1.000000e+00 : f32
    %189 = vector.broadcast %cst_51 : f32 to vector<8x256xf32>
    %190 = arith.addf %189, %188 : vector<8x256xf32>
    %191 = arith.divf %189, %190 : vector<8x256xf32>
    %192 = vector.extract_strided_slice %191 {offsets = [0, 0], sizes = [8, 128], strides = [1, 1]} : vector<8x256xf32> to vector<8x128xf32>
    %193 = vector.extract_strided_slice %191 {offsets = [0, 128], sizes = [8, 128], strides = [1, 1]} : vector<8x256xf32> to vector<8x128xf32>
    %194 = vector.extract_strided_slice %185 {offsets = [0, 256], sizes = [8, 128], strides = [1, 1]} : vector<8x512xf32> to vector<8x128xf32>
    %195 = math.tanh %194 : vector<8x128xf32>
    %196 = vector.extract_strided_slice %185 {offsets = [0, 384], sizes = [8, 128], strides = [1, 1]} : vector<8x512xf32> to vector<8x128xf32>
    %197 = arith.negf %196 : vector<8x128xf32>
    %198 = math.exp %197 : vector<8x128xf32>
    %cst_52 = arith.constant 1.000000e+00 : f32
    %199 = vector.broadcast %cst_52 : f32 to vector<8x128xf32>
    %200 = arith.addf %199, %198 : vector<8x128xf32>
    %201 = arith.divf %199, %200 : vector<8x128xf32>
    %202 = arith.mulf %193, %164 : vector<8x128xf32>
    %203 = arith.mulf %192, %195 : vector<8x128xf32>
    %204 = arith.addf %202, %203 : vector<8x128xf32>
    %205 = math.tanh %204 : vector<8x128xf32>
    %206 = arith.mulf %201, %205 : vector<8x128xf32>
    %c0_53 = arith.constant 0 : index
    %c5 = arith.constant 5 : index
    %207 = vector.load %arg0[%c0_53, %c5] : memref<8x8xf32, #tpu.memory_space<vmem>>, vector<8x1xf32>
    %208 = vector.broadcast %207 : vector<8x1xf32> to vector<8x512xf32>
    %209 = vector.broadcast %0 : vector<1x512xf32> to vector<8x512xf32>
    %210 = arith.mulf %208, %209 : vector<8x512xf32>
    %c0_54 = arith.constant 0 : index
    %c5_55 = arith.constant 5 : index
    %211 = vector.load %arg1[%c0_54, %c5_55] : memref<8x8xf32, #tpu.memory_space<vmem>>, vector<8x1xf32>
    %212 = vector.broadcast %211 : vector<8x1xf32> to vector<8x512xf32>
    %213 = vector.broadcast %1 : vector<1x512xf32> to vector<8x512xf32>
    %214 = arith.mulf %212, %213 : vector<8x512xf32>
    %215 = arith.addf %210, %214 : vector<8x512xf32>
    %c0_56 = arith.constant 0 : index
    %c5_57 = arith.constant 5 : index
    %216 = vector.load %arg2[%c0_56, %c5_57] : memref<8x8xf32, #tpu.memory_space<vmem>>, vector<8x1xf32>
    %217 = vector.broadcast %216 : vector<8x1xf32> to vector<8x512xf32>
    %218 = vector.broadcast %2 : vector<1x512xf32> to vector<8x512xf32>
    %219 = arith.mulf %217, %218 : vector<8x512xf32>
    %220 = arith.addf %215, %219 : vector<8x512xf32>
    %221 = vector.broadcast %3 : vector<1x512xf32> to vector<8x512xf32>
    %222 = arith.addf %220, %221 : vector<8x512xf32>
    %223 = arith.truncf %206 : vector<8x128xf32> to vector<8x128xbf16>
    %cst_58 = arith.constant dense<0.000000e+00> : vector<8x512xf32>
    %224 = tpu.matmul %223, %4, %cst_58 {dimension_numbers = #tpu.dot_dimension_numbers<[1], [0], [0], [1], [0, 0, 1, 1], [], []>} : vector<8x128xbf16>, vector<128x512xbf16>, vector<8x512xf32> -> vector<8x512xf32>
    %225 = arith.addf %222, %224 : vector<8x512xf32>
    %226 = vector.extract_strided_slice %225 {offsets = [0, 0], sizes = [8, 256], strides = [1, 1]} : vector<8x512xf32> to vector<8x256xf32>
    %227 = arith.negf %226 : vector<8x256xf32>
    %228 = math.exp %227 : vector<8x256xf32>
    %cst_59 = arith.constant 1.000000e+00 : f32
    %229 = vector.broadcast %cst_59 : f32 to vector<8x256xf32>
    %230 = arith.addf %229, %228 : vector<8x256xf32>
    %231 = arith.divf %229, %230 : vector<8x256xf32>
    %232 = vector.extract_strided_slice %231 {offsets = [0, 0], sizes = [8, 128], strides = [1, 1]} : vector<8x256xf32> to vector<8x128xf32>
    %233 = vector.extract_strided_slice %231 {offsets = [0, 128], sizes = [8, 128], strides = [1, 1]} : vector<8x256xf32> to vector<8x128xf32>
    %234 = vector.extract_strided_slice %225 {offsets = [0, 256], sizes = [8, 128], strides = [1, 1]} : vector<8x512xf32> to vector<8x128xf32>
    %235 = math.tanh %234 : vector<8x128xf32>
    %236 = vector.extract_strided_slice %225 {offsets = [0, 384], sizes = [8, 128], strides = [1, 1]} : vector<8x512xf32> to vector<8x128xf32>
    %237 = arith.negf %236 : vector<8x128xf32>
    %238 = math.exp %237 : vector<8x128xf32>
    %cst_60 = arith.constant 1.000000e+00 : f32
    %239 = vector.broadcast %cst_60 : f32 to vector<8x128xf32>
    %240 = arith.addf %239, %238 : vector<8x128xf32>
    %241 = arith.divf %239, %240 : vector<8x128xf32>
    %242 = arith.mulf %233, %204 : vector<8x128xf32>
    %243 = arith.mulf %232, %235 : vector<8x128xf32>
    %244 = arith.addf %242, %243 : vector<8x128xf32>
    %245 = math.tanh %244 : vector<8x128xf32>
    %246 = arith.mulf %241, %245 : vector<8x128xf32>
    %c0_61 = arith.constant 0 : index
    %c6 = arith.constant 6 : index
    %247 = vector.load %arg0[%c0_61, %c6] : memref<8x8xf32, #tpu.memory_space<vmem>>, vector<8x1xf32>
    %248 = vector.broadcast %247 : vector<8x1xf32> to vector<8x512xf32>
    %249 = vector.broadcast %0 : vector<1x512xf32> to vector<8x512xf32>
    %250 = arith.mulf %248, %249 : vector<8x512xf32>
    %c0_62 = arith.constant 0 : index
    %c6_63 = arith.constant 6 : index
    %251 = vector.load %arg1[%c0_62, %c6_63] : memref<8x8xf32, #tpu.memory_space<vmem>>, vector<8x1xf32>
    %252 = vector.broadcast %251 : vector<8x1xf32> to vector<8x512xf32>
    %253 = vector.broadcast %1 : vector<1x512xf32> to vector<8x512xf32>
    %254 = arith.mulf %252, %253 : vector<8x512xf32>
    %255 = arith.addf %250, %254 : vector<8x512xf32>
    %c0_64 = arith.constant 0 : index
    %c6_65 = arith.constant 6 : index
    %256 = vector.load %arg2[%c0_64, %c6_65] : memref<8x8xf32, #tpu.memory_space<vmem>>, vector<8x1xf32>
    %257 = vector.broadcast %256 : vector<8x1xf32> to vector<8x512xf32>
    %258 = vector.broadcast %2 : vector<1x512xf32> to vector<8x512xf32>
    %259 = arith.mulf %257, %258 : vector<8x512xf32>
    %260 = arith.addf %255, %259 : vector<8x512xf32>
    %261 = vector.broadcast %3 : vector<1x512xf32> to vector<8x512xf32>
    %262 = arith.addf %260, %261 : vector<8x512xf32>
    %263 = arith.truncf %246 : vector<8x128xf32> to vector<8x128xbf16>
    %cst_66 = arith.constant dense<0.000000e+00> : vector<8x512xf32>
    %264 = tpu.matmul %263, %4, %cst_66 {dimension_numbers = #tpu.dot_dimension_numbers<[1], [0], [0], [1], [0, 0, 1, 1], [], []>} : vector<8x128xbf16>, vector<128x512xbf16>, vector<8x512xf32> -> vector<8x512xf32>
    %265 = arith.addf %262, %264 : vector<8x512xf32>
    %266 = vector.extract_strided_slice %265 {offsets = [0, 0], sizes = [8, 256], strides = [1, 1]} : vector<8x512xf32> to vector<8x256xf32>
    %267 = arith.negf %266 : vector<8x256xf32>
    %268 = math.exp %267 : vector<8x256xf32>
    %cst_67 = arith.constant 1.000000e+00 : f32
    %269 = vector.broadcast %cst_67 : f32 to vector<8x256xf32>
    %270 = arith.addf %269, %268 : vector<8x256xf32>
    %271 = arith.divf %269, %270 : vector<8x256xf32>
    %272 = vector.extract_strided_slice %271 {offsets = [0, 0], sizes = [8, 128], strides = [1, 1]} : vector<8x256xf32> to vector<8x128xf32>
    %273 = vector.extract_strided_slice %271 {offsets = [0, 128], sizes = [8, 128], strides = [1, 1]} : vector<8x256xf32> to vector<8x128xf32>
    %274 = vector.extract_strided_slice %265 {offsets = [0, 256], sizes = [8, 128], strides = [1, 1]} : vector<8x512xf32> to vector<8x128xf32>
    %275 = math.tanh %274 : vector<8x128xf32>
    %276 = vector.extract_strided_slice %265 {offsets = [0, 384], sizes = [8, 128], strides = [1, 1]} : vector<8x512xf32> to vector<8x128xf32>
    %277 = arith.negf %276 : vector<8x128xf32>
    %278 = math.exp %277 : vector<8x128xf32>
    %cst_68 = arith.constant 1.000000e+00 : f32
    %279 = vector.broadcast %cst_68 : f32 to vector<8x128xf32>
    %280 = arith.addf %279, %278 : vector<8x128xf32>
    %281 = arith.divf %279, %280 : vector<8x128xf32>
    %282 = arith.mulf %273, %244 : vector<8x128xf32>
    %283 = arith.mulf %272, %275 : vector<8x128xf32>
    %284 = arith.addf %282, %283 : vector<8x128xf32>
    %285 = math.tanh %284 : vector<8x128xf32>
    %286 = arith.mulf %281, %285 : vector<8x128xf32>
    %c0_69 = arith.constant 0 : index
    %c7 = arith.constant 7 : index
    %287 = vector.load %arg0[%c0_69, %c7] : memref<8x8xf32, #tpu.memory_space<vmem>>, vector<8x1xf32>
    %288 = vector.broadcast %287 : vector<8x1xf32> to vector<8x512xf32>
    %289 = vector.broadcast %0 : vector<1x512xf32> to vector<8x512xf32>
    %290 = arith.mulf %288, %289 : vector<8x512xf32>
    %c0_70 = arith.constant 0 : index
    %c7_71 = arith.constant 7 : index
    %291 = vector.load %arg1[%c0_70, %c7_71] : memref<8x8xf32, #tpu.memory_space<vmem>>, vector<8x1xf32>
    %292 = vector.broadcast %291 : vector<8x1xf32> to vector<8x512xf32>
    %293 = vector.broadcast %1 : vector<1x512xf32> to vector<8x512xf32>
    %294 = arith.mulf %292, %293 : vector<8x512xf32>
    %295 = arith.addf %290, %294 : vector<8x512xf32>
    %c0_72 = arith.constant 0 : index
    %c7_73 = arith.constant 7 : index
    %296 = vector.load %arg2[%c0_72, %c7_73] : memref<8x8xf32, #tpu.memory_space<vmem>>, vector<8x1xf32>
    %297 = vector.broadcast %296 : vector<8x1xf32> to vector<8x512xf32>
    %298 = vector.broadcast %2 : vector<1x512xf32> to vector<8x512xf32>
    %299 = arith.mulf %297, %298 : vector<8x512xf32>
    %300 = arith.addf %295, %299 : vector<8x512xf32>
    %301 = vector.broadcast %3 : vector<1x512xf32> to vector<8x512xf32>
    %302 = arith.addf %300, %301 : vector<8x512xf32>
    %303 = arith.truncf %286 : vector<8x128xf32> to vector<8x128xbf16>
    %cst_74 = arith.constant dense<0.000000e+00> : vector<8x512xf32>
    %304 = tpu.matmul %303, %4, %cst_74 {dimension_numbers = #tpu.dot_dimension_numbers<[1], [0], [0], [1], [0, 0, 1, 1], [], []>} : vector<8x128xbf16>, vector<128x512xbf16>, vector<8x512xf32> -> vector<8x512xf32>
    %305 = arith.addf %302, %304 : vector<8x512xf32>
    %306 = vector.extract_strided_slice %305 {offsets = [0, 0], sizes = [8, 256], strides = [1, 1]} : vector<8x512xf32> to vector<8x256xf32>
    %307 = arith.negf %306 : vector<8x256xf32>
    %308 = math.exp %307 : vector<8x256xf32>
    %cst_75 = arith.constant 1.000000e+00 : f32
    %309 = vector.broadcast %cst_75 : f32 to vector<8x256xf32>
    %310 = arith.addf %309, %308 : vector<8x256xf32>
    %311 = arith.divf %309, %310 : vector<8x256xf32>
    %312 = vector.extract_strided_slice %311 {offsets = [0, 0], sizes = [8, 128], strides = [1, 1]} : vector<8x256xf32> to vector<8x128xf32>
    %313 = vector.extract_strided_slice %311 {offsets = [0, 128], sizes = [8, 128], strides = [1, 1]} : vector<8x256xf32> to vector<8x128xf32>
    %314 = vector.extract_strided_slice %305 {offsets = [0, 256], sizes = [8, 128], strides = [1, 1]} : vector<8x512xf32> to vector<8x128xf32>
    %315 = math.tanh %314 : vector<8x128xf32>
    %316 = vector.extract_strided_slice %305 {offsets = [0, 384], sizes = [8, 128], strides = [1, 1]} : vector<8x512xf32> to vector<8x128xf32>
    %317 = arith.negf %316 : vector<8x128xf32>
    %318 = math.exp %317 : vector<8x128xf32>
    %cst_76 = arith.constant 1.000000e+00 : f32
    %319 = vector.broadcast %cst_76 : f32 to vector<8x128xf32>
    %320 = arith.addf %319, %318 : vector<8x128xf32>
    %321 = arith.divf %319, %320 : vector<8x128xf32>
    %322 = arith.mulf %313, %284 : vector<8x128xf32>
    %323 = arith.mulf %312, %315 : vector<8x128xf32>
    %324 = arith.addf %322, %323 : vector<8x128xf32>
    %325 = math.tanh %324 : vector<8x128xf32>
    %326 = arith.mulf %321, %325 : vector<8x128xf32>
    %c0_77 = arith.constant 0 : index
    %c0_78 = arith.constant 0 : index
    %327 = vector.load %arg8[%c0_77, %c0_78] : memref<8x128xf32, #tpu.memory_space<vmem>>, vector<8x128xf32>
    tpu.vector_store %arg8[%c0_77, %c0_78], %326 {strides = array<i32>} : memref<8x128xf32, #tpu.memory_space<vmem>>, vector<8x128xf32>,
    return
  }
}

</mosaic_0001>

<llo_original>
// kernel: temperature_model_forward.1
$region0: #{temperature_model_forward.1}
  #allocation0 [shape = 'u32[]', space=smem, size = 0x4, offset = 0x4, fixed_abs, tag = 'smem constant byte address 0x4 - core index']
  #allocation1 [shape = 'u32[144,128]{1,0:T(1,128)}', space=vmem, size = 0x12000, scoped, tag = 'internal scratch']
  %s0 = inlined_call_operand.vmem [shape: f32[8,8], index: 0, kind: input, shape index: {}]
  %s1 = inlined_call_operand.vmem [shape: f32[8,8], index: 1, kind: input, shape index: {}]
  %s2 = inlined_call_operand.vmem [shape: f32[8,8], index: 2, kind: input, shape index: {}]
  %s3 = inlined_call_operand.vmem [shape: f32[3,512], index: 3, kind: input, shape index: {}]
  %s4 = inlined_call_operand.vmem [shape: f32[1,512], index: 4, kind: input, shape index: {}]
  %s5 = inlined_call_operand.vmem [shape: bf16[128,512], index: 5, kind: input, shape index: {}]
  %s6 = inlined_call_operand.vmem [shape: f32[8,128], index: 6, kind: input, shape index: {}]
  %s7 = inlined_call_operand.vmem [shape: f32[8,128], index: 7, kind: input, shape index: {}]
  %s8 = inlined_call_operand.hbm [shape: f32[8,128], index: 8, kind: output, shape index: {}]
  %s9 = sld [smem:[#allocation0]]
  $region42: #{temperature_model_forward.1} parent=0
    _
  %s11 = ssub.s32 1, %s9
  %s12 = scalar_select 0, %s11, %s9
  $region1: #{temperature_model_forward.1} parent=0
    #allocation2 [shape = 'u8[4096]{0}', space=vmem, size = 0x1000, scoped, tag = 'output window, operand 0, single buffered']
    #allocation3 [shape = 's32[1]{0}', space=sflag, size = 0x4, scoped, tag = 'scoped memory for temperature_model_forward.1']
    %13 = vsyncpa [#allocation3], 0
    // Predicated region
    $region2: #{temperature_model_forward.1} parent=1 // pred_check
      _
    $region3: #{temperature_model_forward.1} parent=1 // pred_check_branch
      %15 = sbr.rel (0) target = $region5
    $region4: #{temperature_model_forward.1} parent=1 // pred_region
      _
    $region5: #{temperature_model_forward.1} parent=1 // pred_fallthru
      _
    // Predicated region
    $region6: #{temperature_model_forward.1} parent=1 // pred_check
      _
    $region7: #{temperature_model_forward.1} parent=1 // pred_check_branch
      %17 = sbr.rel (0) target = $region9
    $region8: #{temperature_model_forward.1} parent=1 // pred_region
      _
    $region9: #{temperature_model_forward.1} parent=1 // pred_fallthru
      _
    // Predicated region
    $region10: #{temperature_model_forward.1} parent=1 // pred_check
      _
    $region11: #{temperature_model_forward.1} parent=1 // pred_check_branch
      %19 = sbr.rel (0) target = $region13
    $region12: #{temperature_model_forward.1} parent=1 // pred_region
      _
    $region13: #{temperature_model_forward.1} parent=1 // pred_fallthru
      _
    // Predicated region
    $region14: #{temperature_model_forward.1} parent=1 // pred_check
      _
    $region15: #{temperature_model_forward.1} parent=1 // pred_check_branch
      %21 = sbr.rel (0) target = $region17
    $region16: #{temperature_model_forward.1} parent=1 // pred_region
      _
    $region17: #{temperature_model_forward.1} parent=1 // pred_fallthru
      _
    // Predicated region
    $region18: #{temperature_model_forward.1} parent=1 // pred_check
      _
    $region19: #{temperature_model_forward.1} parent=1 // pred_check_branch
      %23 = sbr.rel (0) target = $region21
    $region20: #{temperature_model_forward.1} parent=1 // pred_region
      _
    $region21: #{temperature_model_forward.1} parent=1 // pred_fallthru
      _
    // Predicated region
    $region22: #{temperature_model_forward.1} parent=1 // pred_check
      _
    $region23: #{temperature_model_forward.1} parent=1 // pred_check_branch
      %25 = sbr.rel (0) target = $region25
    $region24: #{temperature_model_forward.1} parent=1 // pred_region
      _
    $region25: #{temperature_model_forward.1} parent=1 // pred_fallthru
      _
    // Predicated region
    $region26: #{temperature_model_forward.1} parent=1 // pred_check
      _
    $region27: #{temperature_model_forward.1} parent=1 // pred_check_branch
      %27 = sbr.rel (0) target = $region29
    $region28: #{temperature_model_forward.1} parent=1 // pred_region
      _
    $region29: #{temperature_model_forward.1} parent=1 // pred_fallthru
      _
    // Predicated region
    $region30: #{temperature_model_forward.1} parent=1 // pred_check
      _
    $region31: #{temperature_model_forward.1} parent=1 // pred_check_branch
      %29 = sbr.rel (0) target = $region33
    $region32: #{temperature_model_forward.1} parent=1 // pred_region
      _
    $region33: #{temperature_model_forward.1} parent=1 // pred_fallthru
      _
    %v31 = vld [vmem:[%s3] ss:$4 sm:$0xf]
    %s32 = scalar_lea.vmem %s3, 1
    %v33 = vld [vmem:[%s32] ss:$4 sm:$0xf]
    %s34 = scalar_lea.vmem %s3, 2
    %v35 = vld [vmem:[%s34] ss:$4 sm:$0xf]
    %v36 = vld [vmem:[%s4] sm:$0xf]
    %v37 = vld [vmem:[%s5] sm:$0xff]
    %v38 = vld [vmem:[%s5 + $0x8] sm:$0xff]
    %v39 = vld [vmem:[%s5 + $0x10] sm:$0xff]
    %v40 = vld [vmem:[%s5 + $0x18] sm:$0xff]
    %v41 = vld [vmem:[%s5 + $0x20] sm:$0xff]
    %v42 = vld [vmem:[%s5 + $0x28] sm:$0xff]
    %v43 = vld [vmem:[%s5 + $0x30] sm:$0xff]
    %v44 = vld [vmem:[%s5 + $0x38] sm:$0xff]
    %v45 = vld [vmem:[%s5 + $0x40] sm:$0xff]
    %v46 = vld [vmem:[%s5 + $0x48] sm:$0xff]
    %v47 = vld [vmem:[%s5 + $0x50] sm:$0xff]
    %v48 = vld [vmem:[%s5 + $0x58] sm:$0xff]
    %v49 = vld [vmem:[%s5 + $0x60] sm:$0xff]
    %v50 = vld [vmem:[%s5 + $0x68] sm:$0xff]
    %v51 = vld [vmem:[%s5 + $0x70] sm:$0xff]
    %v52 = vld [vmem:[%s5 + $0x78] sm:$0xff]
    %v53 = vld [vmem:[%s5 + $0x80] sm:$0xff]
    %v54 = vld [vmem:[%s5 + $0x88] sm:$0xff]
    %v55 = vld [vmem:[%s5 + $0x90] sm:$0xff]
    %v56 = vld [vmem:[%s5 + $0x98] sm:$0xff]
    %v57 = vld [vmem:[%s5 + $0xa0] sm:$0xff]
    %v58 = vld [vmem:[%s5 + $0xa8] sm:$0xff]
    %v59 = vld [vmem:[%s5 + $0xb0] sm:$0xff]
    %v60 = vld [vmem:[%s5 + $0xb8] sm:$0xff]
    %v61 = vld [vmem:[%s5 + $0xc0] sm:$0xff]
    %v62 = vld [vmem:[%s5 + $0xc8] sm:$0xff]
    %v63 = vld [vmem:[%s5 + $0xd0] sm:$0xff]
    %v64 = vld [vmem:[%s5 + $0xd8] sm:$0xff]
    %v65 = vld [vmem:[%s5 + $0xe0] sm:$0xff]
    %v66 = vld [vmem:[%s5 + $0xe8] sm:$0xff]
    %v67 = vld [vmem:[%s5 + $0xf0] sm:$0xff]
    %v68 = vld [vmem:[%s5 + $0xf8] sm:$0xff]
    %v69 = vld [vmem:[%s6] sm:$0xff]
    %v70 = vld [vmem:[%s7] sm:$0xff]
    %v71 = vld [vmem:[%s0] sm:$0xff]
    %73 = vset.pattern.permute.xlu0 0
    %74 = vperm.xlu0 %73, %v71
    %v75 = vpop.permute.xlu0 %74
    %v78 = vlaneseq
    %v79 = vshrl.u32 %v78, 7
    %v80 = vsub.s32 0, %v79
    %v81 = vrot.slane %v31, %v80
    %v82 = vlaneseq
    %v83 = vshrl.u32 %v82, 7
    %v84 = vsub.s32 1, %v83
    %v85 = vrot.slane %v31, %v84
    %v86 = vlaneseq
    %v87 = vshrl.u32 %v86, 7
    %v88 = vsub.s32 2, %v87
    %v89 = vrot.slane %v31, %v88
    %v90 = vlaneseq
    %v91 = vshrl.u32 %v90, 7
    %v92 = vsub.s32 3, %v91
    %v93 = vrot.slane %v31, %v92
    %v98 = vmul.f32 %v75, %v81
    %v99 = vmul.f32 %v75, %v85
    %v100 = vmul.f32 %v75, %v89
    %v101 = vmul.f32 %v75, %v93
    %v102 = vld [vmem:[%s1] sm:$0xff]
    %104 = vset.pattern.permute.xlu0 0
    %105 = vperm.xlu0 %104, %v102
    %v106 = vpop.permute.xlu0 %105
    %v109 = vlaneseq
    %v110 = vshrl.u32 %v109, 7
    %v111 = vsub.s32 0, %v110
    %v112 = vrot.slane %v33, %v111
    %v113 = vlaneseq
    %v114 = vshrl.u32 %v113, 7
    %v115 = vsub.s32 1, %v114
    %v116 = vrot.slane %v33, %v115
    %v117 = vlaneseq
    %v118 = vshrl.u32 %v117, 7
    %v119 = vsub.s32 2, %v118
    %v120 = vrot.slane %v33, %v119
    %v121 = vlaneseq
    %v122 = vshrl.u32 %v121, 7
    %v123 = vsub.s32 3, %v122
    %v124 = vrot.slane %v33, %v123
    %v129 = vmul.f32 %v106, %v112
    %v130 = vmul.f32 %v106, %v116
    %v131 = vmul.f32 %v106, %v120
    %v132 = vmul.f32 %v106, %v124
    %v133 = vadd.f32 %v98, %v129
    %v134 = vadd.f32 %v99, %v130
    %v135 = vadd.f32 %v100, %v131
    %v136 = vadd.f32 %v101, %v132
    %v137 = vld [vmem:[%s2] sm:$0xff]
    %139 = vset.pattern.permute.xlu0 0
    %140 = vperm.xlu0 %139, %v137
    %v141 = vpop.permute.xlu0 %140
    %v144 = vlaneseq
    %v145 = vshrl.u32 %v144, 7
    %v146 = vsub.s32 0, %v145
    %v147 = vrot.slane %v35, %v146
    %v148 = vlaneseq
    %v149 = vshrl.u32 %v148, 7
    %v150 = vsub.s32 1, %v149
    %v151 = vrot.slane %v35, %v150
    %v152 = vlaneseq
    %v153 = vshrl.u32 %v152, 7
    %v154 = vsub.s32 2, %v153
    %v155 = vrot.slane %v35, %v154
    %v156 = vlaneseq
    %v157 = vshrl.u32 %v156, 7
    %v158 = vsub.s32 3, %v157
    %v159 = vrot.slane %v35, %v158
    %v164 = vmul.f32 %v141, %v147
    %v165 = vmul.f32 %v141, %v151
    %v166 = vmul.f32 %v141, %v155
    %v167 = vmul.f32 %v141, %v159
    %v168 = vadd.f32 %v133, %v164
    %v169 = vadd.f32 %v134, %v165
    %v170 = vadd.f32 %v135, %v166
    %v171 = vadd.f32 %v136, %v167
    %v173 = vlaneseq
    %v174 = vshrl.u32 %v173, 7
    %v175 = vsub.s32 0, %v174
    %v176 = vrot.slane %v36, %v175
    %v177 = vlaneseq
    %v178 = vshrl.u32 %v177, 7
    %v179 = vsub.s32 1, %v178
    %v180 = vrot.slane %v36, %v179
    %v181 = vlaneseq
    %v182 = vshrl.u32 %v181, 7
    %v183 = vsub.s32 2, %v182
    %v184 = vrot.slane %v36, %v183
    %v185 = vlaneseq
    %v186 = vshrl.u32 %v185, 7
    %v187 = vsub.s32 3, %v186
    %v188 = vrot.slane %v36, %v187
    %v193 = vadd.f32 %v168, %v176
    %v194 = vadd.f32 %v169, %v180
    %v195 = vadd.f32 %v170, %v184
    %v196 = vadd.f32 %v171, %v188
    %v197 = vpack.c.bf16 %v69, %v69
    %v230 = vunpack.c.l.b16 %v37
    %v231 = vunpack.c.h.b16 %v37
    %v232 = vunpack.c.l.b16 %v38
    %v233 = vunpack.c.h.b16 %v38
    %v234 = vunpack.c.l.b16 %v39
    %v235 = vunpack.c.h.b16 %v39
    %v236 = vunpack.c.l.b16 %v40
    %v237 = vunpack.c.h.b16 %v40
    %v238 = vunpack.c.l.b16 %v41
    %v239 = vunpack.c.h.b16 %v41
    %v240 = vunpack.c.l.b16 %v42
    %v241 = vunpack.c.h.b16 %v42
    %v242 = vunpack.c.l.b16 %v43
    %v243 = vunpack.c.h.b16 %v43
    %v244 = vunpack.c.l.b16 %v44
    %v245 = vunpack.c.h.b16 %v44
    %v246 = vunpack.c.l.b16 %v45
    %v247 = vunpack.c.h.b16 %v45
    %v248 = vunpack.c.l.b16 %v46
    %v249 = vunpack.c.h.b16 %v46
    %v250 = vunpack.c.l.b16 %v47
    %v251 = vunpack.c.h.b16 %v47
    %v252 = vunpack.c.l.b16 %v48
    %v253 = vunpack.c.h.b16 %v48
    %v254 = vunpack.c.l.b16 %v49
    %v255 = vunpack.c.h.b16 %v49
    %v256 = vunpack.c.l.b16 %v50
    %v257 = vunpack.c.h.b16 %v50
    %v258 = vunpack.c.l.b16 %v51
    %v259 = vunpack.c.h.b16 %v51
    %v260 = vunpack.c.l.b16 %v52
    %v261 = vunpack.c.h.b16 %v52
    %v262 = vunpack.c.l.b16 %v53
    %v263 = vunpack.c.h.b16 %v53
    %v264 = vunpack.c.l.b16 %v54
    %v265 = vunpack.c.h.b16 %v54
    %v266 = vunpack.c.l.b16 %v55
    %v267 = vunpack.c.h.b16 %v55
    %v268 = vunpack.c.l.b16 %v56
    %v269 = vunpack.c.h.b16 %v56
    %v270 = vunpack.c.l.b16 %v57
    %v271 = vunpack.c.h.b16 %v57
    %v272 = vunpack.c.l.b16 %v58
    %v273 = vunpack.c.h.b16 %v58
    %v274 = vunpack.c.l.b16 %v59
    %v275 = vunpack.c.h.b16 %v59
    %v276 = vunpack.c.l.b16 %v60
    %v277 = vunpack.c.h.b16 %v60
    %v278 = vunpack.c.l.b16 %v61
    %v279 = vunpack.c.h.b16 %v61
    %v280 = vunpack.c.l.b16 %v62
    %v281 = vunpack.c.h.b16 %v62
    %v282 = vunpack.c.l.b16 %v63
    %v283 = vunpack.c.h.b16 %v63
    %v284 = vunpack.c.l.b16 %v64
    %v285 = vunpack.c.h.b16 %v64
    %v286 = vunpack.c.l.b16 %v65
    %v287 = vunpack.c.h.b16 %v65
    %v288 = vunpack.c.l.b16 %v66
    %v289 = vunpack.c.h.b16 %v66
    %v290 = vunpack.c.l.b16 %v67
    %v291 = vunpack.c.h.b16 %v67
    %v292 = vunpack.c.l.b16 %v68
    %v293 = vunpack.c.h.b16 %v68
    %v294 = vpack.c.b16 %v234, %v230
    %v295 = vpack.c.b16 %v235, %v231
    %v296 = vpack.c.b16 %v236, %v232
    %v297 = vpack.c.b16 %v237, %v233
    %v298 = vpack.c.b16 %v242, %v238
    %v299 = vpack.c.b16 %v243, %v239
    %v300 = vpack.c.b16 %v244, %v240
    %v301 = vpack.c.b16 %v245, %v241
    %v302 = vpack.c.b16 %v250, %v246
    %v303 = vpack.c.b16 %v251, %v247
    %v304 = vpack.c.b16 %v252, %v248
    %v305 = vpack.c.b16 %v253, %v249
    %v306 = vpack.c.b16 %v258, %v254
    %v307 = vpack.c.b16 %v259, %v255
    %v308 = vpack.c.b16 %v260, %v256
    %v309 = vpack.c.b16 %v261, %v257
    %v310 = vpack.c.b16 %v266, %v262
    %v311 = vpack.c.b16 %v267, %v263
    %v312 = vpack.c.b16 %v268, %v264
    %v313 = vpack.c.b16 %v269, %v265
    %v314 = vpack.c.b16 %v274, %v270
    %v315 = vpack.c.b16 %v275, %v271
    %v316 = vpack.c.b16 %v276, %v272
    %v317 = vpack.c.b16 %v277, %v273
    %v318 = vpack.c.b16 %v282, %v278
    %v319 = vpack.c.b16 %v283, %v279
    %v320 = vpack.c.b16 %v284, %v280
    %v321 = vpack.c.b16 %v285, %v281
    %v322 = vpack.c.b16 %v290, %v286
    %v323 = vpack.c.b16 %v291, %v287
    %v324 = vpack.c.b16 %v292, %v288
    %v325 = vpack.c.b16 %v293, %v289
    %358 = vmatprep.subr.bf16.mxu0 %v323
    %359 = vmatpush1.bf16.msra.mxu0 %v322
    %360 = vmatprep.subr.bf16.mxu0 %v319
    %361 = vmatpush1.bf16.msra.mxu0 %v318
    %362 = vmatprep.subr.bf16.mxu0 %v315
    %363 = vmatpush1.bf16.msra.mxu0 %v314
    %364 = vmatprep.subr.bf16.mxu0 %v311
    %365 = vmatpush1.bf16.msra.mxu0 %v310
    %366 = vmatprep.subr.bf16.mxu0 %v307
    %367 = vmatpush1.bf16.msra.mxu0 %v306
    %368 = vmatprep.subr.bf16.mxu0 %v303
    %369 = vmatpush1.bf16.msra.mxu0 %v302
    %370 = vmatprep.subr.bf16.mxu0 %v299
    %371 = vmatpush1.bf16.msra.mxu0 %v298
    %372 = vmatprep.subr.bf16.mxu0 %v295
    %373 = vmatpush1.bf16.msra.mxu0 %v294
    %374 = vmatprep.subr.bf16.mxu0 0
    %375 = vmatpush2.bf16.msra.mxu0 0
    %376 = vmatprep.subr.bf16.mxu0 0
    %377 = vmatpush2.bf16.msra.mxu0 0
    %378 = vmatprep.subr.bf16.mxu0 0
    %379 = vmatpush2.bf16.msra.mxu0 0
    %380 = vmatprep.subr.bf16.mxu0 0
    %381 = vmatpush2.bf16.msra.mxu0 0
    %382 = vmatprep.subr.bf16.mxu0 0
    %383 = vmatpush2.bf16.msra.mxu0 0
    %384 = vmatprep.subr.bf16.mxu0 0
    %385 = vmatpush2.bf16.msra.mxu0 0
    %386 = vmatprep.subr.bf16.mxu0 0
    %387 = vmatpush2.bf16.msra.mxu0 0
    %388 = vmatprep.subr.bf16.mxu0 0
    %389 = vmatpush2.bf16.msra.mxu0 0
    %390 = vmatprep.mubr.bf16.mxu0 0
    %391 = vmatmul.mubr.bf16.gmra.mxu0 %v197
    %v392 = vpop.f32.mrf.mxu0
    %v393 = vadd.f32 0.0, %v392
    %v394 = vpop.f32.mrf.mxu0
    %v395 = vadd.f32 0.0, %v394
    %v396 = vpop.f32.mrf.mxu0
    %v397 = vpop.f32.mrf.mxu0
    %398 = vdwg.mxu0
    %399 = vmatprep.subr.bf16.mxu0 %v325
    %400 = vmatpush1.bf16.msra.mxu0 %v324
    %401 = vmatprep.subr.bf16.mxu0 %v321
    %402 = vmatpush1.bf16.msra.mxu0 %v320
    %403 = vmatprep.subr.bf16.mxu0 %v317
    %404 = vmatpush1.bf16.msra.mxu0 %v316
    %405 = vmatprep.subr.bf16.mxu0 %v313
    %406 = vmatpush1.bf16.msra.mxu0 %v312
    %407 = vmatprep.subr.bf16.mxu0 %v309
    %408 = vmatpush1.bf16.msra.mxu0 %v308
    %409 = vmatprep.subr.bf16.mxu0 %v305
    %410 = vmatpush1.bf16.msra.mxu0 %v304
    %411 = vmatprep.subr.bf16.mxu0 %v301
    %412 = vmatpush1.bf16.msra.mxu0 %v300
    %413 = vmatprep.subr.bf16.mxu0 %v297
    %414 = vmatpush1.bf16.msra.mxu0 %v296
    %415 = vmatprep.subr.bf16.mxu0 0
    %416 = vmatpush2.bf16.msra.mxu0 0
    %417 = vmatprep.subr.bf16.mxu0 0
    %418 = vmatpush2.bf16.msra.mxu0 0
    %419 = vmatprep.subr.bf16.mxu0 0
    %420 = vmatpush2.bf16.msra.mxu0 0
    %421 = vmatprep.subr.bf16.mxu0 0
    %422 = vmatpush2.bf16.msra.mxu0 0
    %423 = vmatprep.subr.bf16.mxu0 0
    %424 = vmatpush2.bf16.msra.mxu0 0
    %425 = vmatprep.subr.bf16.mxu0 0
    %426 = vmatpush2.bf16.msra.mxu0 0
    %427 = vmatprep.subr.bf16.mxu0 0
    %428 = vmatpush2.bf16.msra.mxu0 0
    %429 = vmatprep.subr.bf16.mxu0 0
    %430 = vmatpush2.bf16.msra.mxu0 0
    %431 = vmatprep.mubr.bf16.mxu0 0
    %432 = vmatmul.mubr.bf16.gmra.mxu0 %v197
    %v433 = vpop.f32.mrf.mxu0
    %v434 = vadd.f32 0.0, %v433
    %v435 = vpop.f32.mrf.mxu0
    %v436 = vadd.f32 0.0, %v435
    %v437 = vpop.f32.mrf.mxu0
    %v438 = vpop.f32.mrf.mxu0
    %439 = vdwg.mxu0
    %v440 = vadd.f32 %v193, %v393
    %v441 = vadd.f32 %v194, %v395
    %v442 = vadd.f32 %v195, %v434
    %v443 = vadd.f32 %v196, %v436
    %v444 = vxor.u32 %v440, 2147483648
    %v445 = vxor.u32 %v441, 2147483648
    %v446 = vmul.f32 %v444, 1.442695
    %v447 = vpow.pop %v446
    %v448 = vmul.f32 %v445, 1.442695
    %v449 = vpow.pop %v448
    %v450 = vadd.f32 %v447, 1.0
    %v451 = vadd.f32 %v449, 1.0
    %v452 = vrcp.pop %v450
    %v453 = vmul.f32 1.0, %v452
    %v454 = vrcp.pop %v451
    %v455 = vmul.f32 1.0, %v454
    %v456 = vtanh.pop %v442
    %v457 = vxor.u32 %v443, 2147483648
    %v458 = vmul.f32 %v457, 1.442695
    %v459 = vpow.pop %v458
    %v460 = vadd.f32 %v459, 1.0
    %v461 = vrcp.pop %v460
    %v462 = vmul.f32 1.0, %v461
    %v463 = vmul.f32 %v455, %v70
    %v464 = vmul.f32 %v453, %v456
    %v465 = vadd.f32 %v463, %v464
    %v466 = vtanh.pop %v465
    %v467 = vmul.f32 %v462, %v466
    %468 = vset.pattern.permute.xlu0 1
    %469 = vperm.xlu0 %468, %v71
    %v470 = vpop.permute.xlu0 %469
    %v472 = vmul.f32 %v470, %v81
    %v473 = vmul.f32 %v470, %v85
    %v474 = vmul.f32 %v470, %v89
    %v475 = vmul.f32 %v470, %v93
    %476 = vset.pattern.permute.xlu0 1
    %477 = vperm.xlu0 %476, %v102
    %v478 = vpop.permute.xlu0 %477
    %v480 = vmul.f32 %v478, %v112
    %v481 = vmul.f32 %v478, %v116
    %v482 = vmul.f32 %v478, %v120
    %v483 = vmul.f32 %v478, %v124
    %v484 = vadd.f32 %v472, %v480
    %v485 = vadd.f32 %v473, %v481
    %v486 = vadd.f32 %v474, %v482
    %v487 = vadd.f32 %v475, %v483
    %488 = vset.pattern.permute.xlu0 1
    %489 = vperm.xlu0 %488, %v137
    %v490 = vpop.permute.xlu0 %489
    %v492 = vmul.f32 %v490, %v147
    %v493 = vmul.f32 %v490, %v151
    %v494 = vmul.f32 %v490, %v155
    %v495 = vmul.f32 %v490, %v159
    %v496 = vadd.f32 %v484, %v492
    %v497 = vadd.f32 %v485, %v493
    %v498 = vadd.f32 %v486, %v494
    %v499 = vadd.f32 %v487, %v495
    %v500 = vadd.f32 %v496, %v176
    %v501 = vadd.f32 %v497, %v180
    %v502 = vadd.f32 %v498, %v184
    %v503 = vadd.f32 %v499, %v188
    %v504 = vpack.c.bf16 %v467, %v467
    %505 = vmatprep.subr.bf16.mxu0 %v323
    %506 = vmatpush1.bf16.msra.mxu0 %v322
    %507 = vmatprep.subr.bf16.mxu0 %v319
    %508 = vmatpush1.bf16.msra.mxu0 %v318
    %509 = vmatprep.subr.bf16.mxu0 %v315
    %510 = vmatpush1.bf16.msra.mxu0 %v314
    %511 = vmatprep.subr.bf16.mxu0 %v311
    %512 = vmatpush1.bf16.msra.mxu0 %v310
    %513 = vmatprep.subr.bf16.mxu0 %v307
    %514 = vmatpush1.bf16.msra.mxu0 %v306
    %515 = vmatprep.subr.bf16.mxu0 %v303
    %516 = vmatpush1.bf16.msra.mxu0 %v302
    %517 = vmatprep.subr.bf16.mxu0 %v299
    %518 = vmatpush1.bf16.msra.mxu0 %v298
    %519 = vmatprep.subr.bf16.mxu0 %v295
    %520 = vmatpush1.bf16.msra.mxu0 %v294
    %521 = vmatprep.subr.bf16.mxu0 0
    %522 = vmatpush2.bf16.msra.mxu0 0
    %523 = vmatprep.subr.bf16.mxu0 0
    %524 = vmatpush2.bf16.msra.mxu0 0
    %525 = vmatprep.subr.bf16.mxu0 0
    %526 = vmatpush2.bf16.msra.mxu0 0
    %527 = vmatprep.subr.bf16.mxu0 0
    %528 = vmatpush2.bf16.msra.mxu0 0
    %529 = vmatprep.subr.bf16.mxu0 0
    %530 = vmatpush2.bf16.msra.mxu0 0
    %531 = vmatprep.subr.bf16.mxu0 0
    %532 = vmatpush2.bf16.msra.mxu0 0
    %533 = vmatprep.subr.bf16.mxu0 0
    %534 = vmatpush2.bf16.msra.mxu0 0
    %535 = vmatprep.subr.bf16.mxu0 0
    %536 = vmatpush2.bf16.msra.mxu0 0
    %537 = vmatprep.mubr.bf16.mxu0 0
    %538 = vmatmul.mubr.bf16.gmra.mxu0 %v504
    %v539 = vpop.f32.mrf.mxu0
    %v540 = vadd.f32 0.0, %v539
    %v541 = vpop.f32.mrf.mxu0
    %v542 = vadd.f32 0.0, %v541
    %v543 = vpop.f32.mrf.mxu0
    %v544 = vpop.f32.mrf.mxu0
    %545 = vdwg.mxu0
    %546 = vmatprep.subr.bf16.mxu0 %v325
    %547 = vmatpush1.bf16.msra.mxu0 %v324
    %548 = vmatprep.subr.bf16.mxu0 %v321
    %549 = vmatpush1.bf16.msra.mxu0 %v320
    %550 = vmatprep.subr.bf16.mxu0 %v317
    %551 = vmatpush1.bf16.msra.mxu0 %v316
    %552 = vmatprep.subr.bf16.mxu0 %v313
    %553 = vmatpush1.bf16.msra.mxu0 %v312
    %554 = vmatprep.subr.bf16.mxu0 %v309
    %555 = vmatpush1.bf16.msra.mxu0 %v308
    %556 = vmatprep.subr.bf16.mxu0 %v305
    %557 = vmatpush1.bf16.msra.mxu0 %v304
    %558 = vmatprep.subr.bf16.mxu0 %v301
    %559 = vmatpush1.bf16.msra.mxu0 %v300
    %560 = vmatprep.subr.bf16.mxu0 %v297
    %561 = vmatpush1.bf16.msra.mxu0 %v296
    %562 = vmatprep.subr.bf16.mxu0 0
    %563 = vmatpush2.bf16.msra.mxu0 0
    %564 = vmatprep.subr.bf16.mxu0 0
    %565 = vmatpush2.bf16.msra.mxu0 0
    %566 = vmatprep.subr.bf16.mxu0 0
    %567 = vmatpush2.bf16.msra.mxu0 0
    %568 = vmatprep.subr.bf16.mxu0 0
    %569 = vmatpush2.bf16.msra.mxu0 0
    %570 = vmatprep.subr.bf16.mxu0 0
    %571 = vmatpush2.bf16.msra.mxu0 0
    %572 = vmatprep.subr.bf16.mxu0 0
    %573 = vmatpush2.bf16.msra.mxu0 0
    %574 = vmatprep.subr.bf16.mxu0 0
    %575 = vmatpush2.bf16.msra.mxu0 0
    %576 = vmatprep.subr.bf16.mxu0 0
    %577 = vmatpush2.bf16.msra.mxu0 0
    %578 = vmatprep.mubr.bf16.mxu0 0
    %579 = vmatmul.mubr.bf16.gmra.mxu0 %v504
    %v580 = vpop.f32.mrf.mxu0
    %v581 = vadd.f32 0.0, %v580
    %v582 = vpop.f32.mrf.mxu0
    %v583 = vadd.f32 0.0, %v582
    %v584 = vpop.f32.mrf.mxu0
    %v585 = vpop.f32.mrf.mxu0
    %586 = vdwg.mxu0
    %v587 = vadd.f32 %v500, %v540
    %v588 = vadd.f32 %v501, %v542
    %v589 = vadd.f32 %v502, %v581
    %v590 = vadd.f32 %v503, %v583
    %v591 = vxor.u32 %v587, 2147483648
    %v592 = vxor.u32 %v588, 2147483648
    %v593 = vmul.f32 %v591, 1.442695
    %v594 = vpow.pop %v593
    %v595 = vmul.f32 %v592, 1.442695
    %v596 = vpow.pop %v595
    %v597 = vadd.f32 %v594, 1.0
    %v598 = vadd.f32 %v596, 1.0
    %v599 = vrcp.pop %v597
    %v600 = vmul.f32 1.0, %v599
    %v601 = vrcp.pop %v598
    %v602 = vmul.f32 1.0, %v601
    %v603 = vtanh.pop %v589
    %v604 = vxor.u32 %v590, 2147483648
    %v605 = vmul.f32 %v604, 1.442695
    %v606 = vpow.pop %v605
    %v607 = vadd.f32 %v606, 1.0
    %v608 = vrcp.pop %v607
    %v609 = vmul.f32 1.0, %v608
    %v610 = vmul.f32 %v602, %v465
    %v611 = vmul.f32 %v600, %v603
    %v612 = vadd.f32 %v610, %v611
    %v613 = vtanh.pop %v612
    %v614 = vmul.f32 %v609, %v613
    %615 = vset.pattern.permute.xlu0 2
    %616 = vperm.xlu0 %615, %v71
    %v617 = vpop.permute.xlu0 %616
    %v619 = vmul.f32 %v617, %v81
    %v620 = vmul.f32 %v617, %v85
    %v621 = vmul.f32 %v617, %v89
    %v622 = vmul.f32 %v617, %v93
    %623 = vset.pattern.permute.xlu0 2
    %624 = vperm.xlu0 %623, %v102
    %v625 = vpop.permute.xlu0 %624
    %v627 = vmul.f32 %v625, %v112
    %v628 = vmul.f32 %v625, %v116
    %v629 = vmul.f32 %v625, %v120
    %v630 = vmul.f32 %v625, %v124
    %v631 = vadd.f32 %v619, %v627
    %v632 = vadd.f32 %v620, %v628
    %v633 = vadd.f32 %v621, %v629
    %v634 = vadd.f32 %v622, %v630
    %635 = vset.pattern.permute.xlu0 2
    %636 = vperm.xlu0 %635, %v137
    %v637 = vpop.permute.xlu0 %636
    %v639 = vmul.f32 %v637, %v147
    %v640 = vmul.f32 %v637, %v151
    %v641 = vmul.f32 %v637, %v155
    %v642 = vmul.f32 %v637, %v159
    %v643 = vadd.f32 %v631, %v639
    %v644 = vadd.f32 %v632, %v640
    %v645 = vadd.f32 %v633, %v641
    %v646 = vadd.f32 %v634, %v642
    %v647 = vadd.f32 %v643, %v176
    %v648 = vadd.f32 %v644, %v180
    %v649 = vadd.f32 %v645, %v184
    %v650 = vadd.f32 %v646, %v188
    %v651 = vpack.c.bf16 %v614, %v614
    %652 = vmatprep.subr.bf16.mxu0 %v323
    %653 = vmatpush1.bf16.msra.mxu0 %v322
    %654 = vmatprep.subr.bf16.mxu0 %v319
    %655 = vmatpush1.bf16.msra.mxu0 %v318
    %656 = vmatprep.subr.bf16.mxu0 %v315
    %657 = vmatpush1.bf16.msra.mxu0 %v314
    %658 = vmatprep.subr.bf16.mxu0 %v311
    %659 = vmatpush1.bf16.msra.mxu0 %v310
    %660 = vmatprep.subr.bf16.mxu0 %v307
    %661 = vmatpush1.bf16.msra.mxu0 %v306
    %662 = vmatprep.subr.bf16.mxu0 %v303
    %663 = vmatpush1.bf16.msra.mxu0 %v302
    %664 = vmatprep.subr.bf16.mxu0 %v299
    %665 = vmatpush1.bf16.msra.mxu0 %v298
    %666 = vmatprep.subr.bf16.mxu0 %v295
    %667 = vmatpush1.bf16.msra.mxu0 %v294
    %668 = vmatprep.subr.bf16.mxu0 0
    %669 = vmatpush2.bf16.msra.mxu0 0
    %670 = vmatprep.subr.bf16.mxu0 0
    %671 = vmatpush2.bf16.msra.mxu0 0
    %672 = vmatprep.subr.bf16.mxu0 0
    %673 = vmatpush2.bf16.msra.mxu0 0
    %674 = vmatprep.subr.bf16.mxu0 0
    %675 = vmatpush2.bf16.msra.mxu0 0
    %676 = vmatprep.subr.bf16.mxu0 0
    %677 = vmatpush2.bf16.msra.mxu0 0
    %678 = vmatprep.subr.bf16.mxu0 0
    %679 = vmatpush2.bf16.msra.mxu0 0
    %680 = vmatprep.subr.bf16.mxu0 0
    %681 = vmatpush2.bf16.msra.mxu0 0
    %682 = vmatprep.subr.bf16.mxu0 0
    %683 = vmatpush2.bf16.msra.mxu0 0
    %684 = vmatprep.mubr.bf16.mxu0 0
    %685 = vmatmul.mubr.bf16.gmra.mxu0 %v651
    %v686 = vpop.f32.mrf.mxu0
    %v687 = vadd.f32 0.0, %v686
    %v688 = vpop.f32.mrf.mxu0
    %v689 = vadd.f32 0.0, %v688
    %v690 = vpop.f32.mrf.mxu0
    %v691 = vpop.f32.mrf.mxu0
    %692 = vdwg.mxu0
    %693 = vmatprep.subr.bf16.mxu0 %v325
    %694 = vmatpush1.bf16.msra.mxu0 %v324
    %695 = vmatprep.subr.bf16.mxu0 %v321
    %696 = vmatpush1.bf16.msra.mxu0 %v320
    %697 = vmatprep.subr.bf16.mxu0 %v317
    %698 = vmatpush1.bf16.msra.mxu0 %v316
    %699 = vmatprep.subr.bf16.mxu0 %v313
    %700 = vmatpush1.bf16.msra.mxu0 %v312
    %701 = vmatprep.subr.bf16.mxu0 %v309
    %702 = vmatpush1.bf16.msra.mxu0 %v308
    %703 = vmatprep.subr.bf16.mxu0 %v305
    %704 = vmatpush1.bf16.msra.mxu0 %v304
    %705 = vmatprep.subr.bf16.mxu0 %v301
    %706 = vmatpush1.bf16.msra.mxu0 %v300
    %707 = vmatprep.subr.bf16.mxu0 %v297
    %708 = vmatpush1.bf16.msra.mxu0 %v296
    %709 = vmatprep.subr.bf16.mxu0 0
    %710 = vmatpush2.bf16.msra.mxu0 0
    %711 = vmatprep.subr.bf16.mxu0 0
    %712 = vmatpush2.bf16.msra.mxu0 0
    %713 = vmatprep.subr.bf16.mxu0 0
    %714 = vmatpush2.bf16.msra.mxu0 0
    %715 = vmatprep.subr.bf16.mxu0 0
    %716 = vmatpush2.bf16.msra.mxu0 0
    %717 = vmatprep.subr.bf16.mxu0 0
    %718 = vmatpush2.bf16.msra.mxu0 0
    %719 = vmatprep.subr.bf16.mxu0 0
    %720 = vmatpush2.bf16.msra.mxu0 0
    %721 = vmatprep.subr.bf16.mxu0 0
    %722 = vmatpush2.bf16.msra.mxu0 0
    %723 = vmatprep.subr.bf16.mxu0 0
    %724 = vmatpush2.bf16.msra.mxu0 0
    %725 = vmatprep.mubr.bf16.mxu0 0
    %726 = vmatmul.mubr.bf16.gmra.mxu0 %v651
    %v727 = vpop.f32.mrf.mxu0
    %v728 = vadd.f32 0.0, %v727
    %v729 = vpop.f32.mrf.mxu0
    %v730 = vadd.f32 0.0, %v729
    %v731 = vpop.f32.mrf.mxu0
    %v732 = vpop.f32.mrf.mxu0
    %733 = vdwg.mxu0
    %v734 = vadd.f32 %v647, %v687
    %v735 = vadd.f32 %v648, %v689
    %v736 = vadd.f32 %v649, %v728
    %v737 = vadd.f32 %v650, %v730
    %v738 = vxor.u32 %v734, 2147483648
    %v739 = vxor.u32 %v735, 2147483648
    %v740 = vmul.f32 %v738, 1.442695
    %v741 = vpow.pop %v740
    %v742 = vmul.f32 %v739, 1.442695
    %v743 = vpow.pop %v742
    %v744 = vadd.f32 %v741, 1.0
    %v745 = vadd.f32 %v743, 1.0
    %v746 = vrcp.pop %v744
    %v747 = vmul.f32 1.0, %v746
    %v748 = vrcp.pop %v745
    %v749 = vmul.f32 1.0, %v748
    %v750 = vtanh.pop %v736
    %v751 = vxor.u32 %v737, 2147483648
    %v752 = vmul.f32 %v751, 1.442695
    %v753 = vpow.pop %v752
    %v754 = vadd.f32 %v753, 1.0
    %v755 = vrcp.pop %v754
    %v756 = vmul.f32 1.0, %v755
    %v757 = vmul.f32 %v749, %v612
    %v758 = vmul.f32 %v747, %v750
    %v759 = vadd.f32 %v757, %v758
    %v760 = vtanh.pop %v759
    %v761 = vmul.f32 %v756, %v760
    %762 = vset.pattern.permute.xlu0 3
    %763 = vperm.xlu0 %762, %v71
    %v764 = vpop.permute.xlu0 %763
    %v766 = vmul.f32 %v764, %v81
    %v767 = vmul.f32 %v764, %v85
    %v768 = vmul.f32 %v764, %v89
    %v769 = vmul.f32 %v764, %v93
    %770 = vset.pattern.permute.xlu0 3
    %771 = vperm.xlu0 %770, %v102
    %v772 = vpop.permute.xlu0 %771
    %v774 = vmul.f32 %v772, %v112
    %v775 = vmul.f32 %v772, %v116
    %v776 = vmul.f32 %v772, %v120
    %v777 = vmul.f32 %v772, %v124
    %v778 = vadd.f32 %v766, %v774
    %v779 = vadd.f32 %v767, %v775
    %v780 = vadd.f32 %v768, %v776
    %v781 = vadd.f32 %v769, %v777
    %782 = vset.pattern.permute.xlu0 3
    %783 = vperm.xlu0 %782, %v137
    %v784 = vpop.permute.xlu0 %783
    %v786 = vmul.f32 %v784, %v147
    %v787 = vmul.f32 %v784, %v151
    %v788 = vmul.f32 %v784, %v155
    %v789 = vmul.f32 %v784, %v159
    %v790 = vadd.f32 %v778, %v786
    %v791 = vadd.f32 %v779, %v787
    %v792 = vadd.f32 %v780, %v788
    %v793 = vadd.f32 %v781, %v789
    %v794 = vadd.f32 %v790, %v176
    %v795 = vadd.f32 %v791, %v180
    %v796 = vadd.f32 %v792, %v184
    %v797 = vadd.f32 %v793, %v188
    %v798 = vpack.c.bf16 %v761, %v761
    %799 = vmatprep.subr.bf16.mxu0 %v323
    %800 = vmatpush1.bf16.msra.mxu0 %v322
    %801 = vmatprep.subr.bf16.mxu0 %v319
    %802 = vmatpush1.bf16.msra.mxu0 %v318
    %803 = vmatprep.subr.bf16.mxu0 %v315
    %804 = vmatpush1.bf16.msra.mxu0 %v314
    %805 = vmatprep.subr.bf16.mxu0 %v311
    %806 = vmatpush1.bf16.msra.mxu0 %v310
    %807 = vmatprep.subr.bf16.mxu0 %v307
    %808 = vmatpush1.bf16.msra.mxu0 %v306
    %809 = vmatprep.subr.bf16.mxu0 %v303
    %810 = vmatpush1.bf16.msra.mxu0 %v302
    %811 = vmatprep.subr.bf16.mxu0 %v299
    %812 = vmatpush1.bf16.msra.mxu0 %v298
    %813 = vmatprep.subr.bf16.mxu0 %v295
    %814 = vmatpush1.bf16.msra.mxu0 %v294
    %815 = vmatprep.subr.bf16.mxu0 0
    %816 = vmatpush2.bf16.msra.mxu0 0
    %817 = vmatprep.subr.bf16.mxu0 0
    %818 = vmatpush2.bf16.msra.mxu0 0
    %819 = vmatprep.subr.bf16.mxu0 0
    %820 = vmatpush2.bf16.msra.mxu0 0
    %821 = vmatprep.subr.bf16.mxu0 0
    %822 = vmatpush2.bf16.msra.mxu0 0
    %823 = vmatprep.subr.bf16.mxu0 0
    %824 = vmatpush2.bf16.msra.mxu0 0
    %825 = vmatprep.subr.bf16.mxu0 0
    %826 = vmatpush2.bf16.msra.mxu0 0
    %827 = vmatprep.subr.bf16.mxu0 0
    %828 = vmatpush2.bf16.msra.mxu0 0
    %829 = vmatprep.subr.bf16.mxu0 0
    %830 = vmatpush2.bf16.msra.mxu0 0
    %831 = vmatprep.mubr.bf16.mxu0 0
    %832 = vmatmul.mubr.bf16.gmra.mxu0 %v798
    %v833 = vpop.f32.mrf.mxu0
    %v834 = vadd.f32 0.0, %v833
    %v835 = vpop.f32.mrf.mxu0
    %v836 = vadd.f32 0.0, %v835
    %v837 = vpop.f32.mrf.mxu0
    %v838 = vpop.f32.mrf.mxu0
    %839 = vdwg.mxu0
    %840 = vmatprep.subr.bf16.mxu0 %v325
    %841 = vmatpush1.bf16.msra.mxu0 %v324
    %842 = vmatprep.subr.bf16.mxu0 %v321
    %843 = vmatpush1.bf16.msra.mxu0 %v320
    %844 = vmatprep.subr.bf16.mxu0 %v317
    %845 = vmatpush1.bf16.msra.mxu0 %v316
    %846 = vmatprep.subr.bf16.mxu0 %v313
    %847 = vmatpush1.bf16.msra.mxu0 %v312
    %848 = vmatprep.subr.bf16.mxu0 %v309
    %849 = vmatpush1.bf16.msra.mxu0 %v308
    %850 = vmatprep.subr.bf16.mxu0 %v305
    %851 = vmatpush1.bf16.msra.mxu0 %v304
    %852 = vmatprep.subr.bf16.mxu0 %v301
    %853 = vmatpush1.bf16.msra.mxu0 %v300
    %854 = vmatprep.subr.bf16.mxu0 %v297
    %855 = vmatpush1.bf16.msra.mxu0 %v296
    %856 = vmatprep.subr.bf16.mxu0 0
    %857 = vmatpush2.bf16.msra.mxu0 0
    %858 = vmatprep.subr.bf16.mxu0 0
    %859 = vmatpush2.bf16.msra.mxu0 0
    %860 = vmatprep.subr.bf16.mxu0 0
    %861 = vmatpush2.bf16.msra.mxu0 0
    %862 = vmatprep.subr.bf16.mxu0 0
    %863 = vmatpush2.bf16.msra.mxu0 0
    %864 = vmatprep.subr.bf16.mxu0 0
    %865 = vmatpush2.bf16.msra.mxu0 0
    %866 = vmatprep.subr.bf16.mxu0 0
    %867 = vmatpush2.bf16.msra.mxu0 0
    %868 = vmatprep.subr.bf16.mxu0 0
    %869 = vmatpush2.bf16.msra.mxu0 0
    %870 = vmatprep.subr.bf16.mxu0 0
    %871 = vmatpush2.bf16.msra.mxu0 0
    %872 = vmatprep.mubr.bf16.mxu0 0
    %873 = vmatmul.mubr.bf16.gmra.mxu0 %v798
    %v874 = vpop.f32.mrf.mxu0
    %v875 = vadd.f32 0.0, %v874
    %v876 = vpop.f32.mrf.mxu0
    %v877 = vadd.f32 0.0, %v876
    %v878 = vpop.f32.mrf.mxu0
    %v879 = vpop.f32.mrf.mxu0
    %880 = vdwg.mxu0
    %v881 = vadd.f32 %v794, %v834
    %v882 = vadd.f32 %v795, %v836
    %v883 = vadd.f32 %v796, %v875
    %v884 = vadd.f32 %v797, %v877
    %v885 = vxor.u32 %v881, 2147483648
    %v886 = vxor.u32 %v882, 2147483648
    %v887 = vmul.f32 %v885, 1.442695
    %v888 = vpow.pop %v887
    %v889 = vmul.f32 %v886, 1.442695
    %v890 = vpow.pop %v889
    %v891 = vadd.f32 %v888, 1.0
    %v892 = vadd.f32 %v890, 1.0
    %v893 = vrcp.pop %v891
    %v894 = vmul.f32 1.0, %v893
    %v895 = vrcp.pop %v892
    %v896 = vmul.f32 1.0, %v895
    %v897 = vtanh.pop %v883
    %v898 = vxor.u32 %v884, 2147483648
    %v899 = vmul.f32 %v898, 1.442695
    %v900 = vpow.pop %v899
    %v901 = vadd.f32 %v900, 1.0
    %v902 = vrcp.pop %v901
    %v903 = vmul.f32 1.0, %v902
    %v904 = vmul.f32 %v896, %v759
    %v905 = vmul.f32 %v894, %v897
    %v906 = vadd.f32 %v904, %v905
    %v907 = vtanh.pop %v906
    %v908 = vmul.f32 %v903, %v907
    %909 = vset.pattern.permute.xlu0 4
    %910 = vperm.xlu0 %909, %v71
    %v911 = vpop.permute.xlu0 %910
    %v913 = vmul.f32 %v911, %v81
    %v914 = vmul.f32 %v911, %v85
    %v915 = vmul.f32 %v911, %v89
    %v916 = vmul.f32 %v911, %v93
    %917 = vset.pattern.permute.xlu0 4
    %918 = vperm.xlu0 %917, %v102
    %v919 = vpop.permute.xlu0 %918
    %v921 = vmul.f32 %v919, %v112
    %v922 = vmul.f32 %v919, %v116
    %v923 = vmul.f32 %v919, %v120
    %v924 = vmul.f32 %v919, %v124
    %v925 = vadd.f32 %v913, %v921
    %v926 = vadd.f32 %v914, %v922
    %v927 = vadd.f32 %v915, %v923
    %v928 = vadd.f32 %v916, %v924
    %929 = vset.pattern.permute.xlu0 4
    %930 = vperm.xlu0 %929, %v137
    %v931 = vpop.permute.xlu0 %930
    %v933 = vmul.f32 %v931, %v147
    %v934 = vmul.f32 %v931, %v151
    %v935 = vmul.f32 %v931, %v155
    %v936 = vmul.f32 %v931, %v159
    %v937 = vadd.f32 %v925, %v933
    %v938 = vadd.f32 %v926, %v934
    %v939 = vadd.f32 %v927, %v935
    %v940 = vadd.f32 %v928, %v936
    %v941 = vadd.f32 %v937, %v176
    %v942 = vadd.f32 %v938, %v180
    %v943 = vadd.f32 %v939, %v184
    %v944 = vadd.f32 %v940, %v188
    %v945 = vpack.c.bf16 %v908, %v908
    %946 = vmatprep.subr.bf16.mxu0 %v323
    %947 = vmatpush1.bf16.msra.mxu0 %v322
    %948 = vmatprep.subr.bf16.mxu0 %v319
    %949 = vmatpush1.bf16.msra.mxu0 %v318
    %950 = vmatprep.subr.bf16.mxu0 %v315
    %951 = vmatpush1.bf16.msra.mxu0 %v314
    %952 = vmatprep.subr.bf16.mxu0 %v311
    %953 = vmatpush1.bf16.msra.mxu0 %v310
    %954 = vmatprep.subr.bf16.mxu0 %v307
    %955 = vmatpush1.bf16.msra.mxu0 %v306
    %956 = vmatprep.subr.bf16.mxu0 %v303
    %957 = vmatpush1.bf16.msra.mxu0 %v302
    %958 = vmatprep.subr.bf16.mxu0 %v299
    %959 = vmatpush1.bf16.msra.mxu0 %v298
    %960 = vmatprep.subr.bf16.mxu0 %v295
    %961 = vmatpush1.bf16.msra.mxu0 %v294
    %962 = vmatprep.subr.bf16.mxu0 0
    %963 = vmatpush2.bf16.msra.mxu0 0
    %964 = vmatprep.subr.bf16.mxu0 0
    %965 = vmatpush2.bf16.msra.mxu0 0
    %966 = vmatprep.subr.bf16.mxu0 0
    %967 = vmatpush2.bf16.msra.mxu0 0
    %968 = vmatprep.subr.bf16.mxu0 0
    %969 = vmatpush2.bf16.msra.mxu0 0
    %970 = vmatprep.subr.bf16.mxu0 0
    %971 = vmatpush2.bf16.msra.mxu0 0
    %972 = vmatprep.subr.bf16.mxu0 0
    %973 = vmatpush2.bf16.msra.mxu0 0
    %974 = vmatprep.subr.bf16.mxu0 0
    %975 = vmatpush2.bf16.msra.mxu0 0
    %976 = vmatprep.subr.bf16.mxu0 0
    %977 = vmatpush2.bf16.msra.mxu0 0
    %978 = vmatprep.mubr.bf16.mxu0 0
    %979 = vmatmul.mubr.bf16.gmra.mxu0 %v945
    %v980 = vpop.f32.mrf.mxu0
    %v981 = vadd.f32 0.0, %v980
    %v982 = vpop.f32.mrf.mxu0
    %v983 = vadd.f32 0.0, %v982
    %v984 = vpop.f32.mrf.mxu0
    %v985 = vpop.f32.mrf.mxu0
    %986 = vdwg.mxu0
    %987 = vmatprep.subr.bf16.mxu0 %v325
    %988 = vmatpush1.bf16.msra.mxu0 %v324
    %989 = vmatprep.subr.bf16.mxu0 %v321
    %990 = vmatpush1.bf16.msra.mxu0 %v320
    %991 = vmatprep.subr.bf16.mxu0 %v317
    %992 = vmatpush1.bf16.msra.mxu0 %v316
    %993 = vmatprep.subr.bf16.mxu0 %v313
    %994 = vmatpush1.bf16.msra.mxu0 %v312
    %995 = vmatprep.subr.bf16.mxu0 %v309
    %996 = vmatpush1.bf16.msra.mxu0 %v308
    %997 = vmatprep.subr.bf16.mxu0 %v305
    %998 = vmatpush1.bf16.msra.mxu0 %v304
    %999 = vmatprep.subr.bf16.mxu0 %v301
    %1000 = vmatpush1.bf16.msra.mxu0 %v300
    %1001 = vmatprep.subr.bf16.mxu0 %v297
    %1002 = vmatpush1.bf16.msra.mxu0 %v296
    %1003 = vmatprep.subr.bf16.mxu0 0
    %1004 = vmatpush2.bf16.msra.mxu0 0
    %1005 = vmatprep.subr.bf16.mxu0 0
    %1006 = vmatpush2.bf16.msra.mxu0 0
    %1007 = vmatprep.subr.bf16.mxu0 0
    %1008 = vmatpush2.bf16.msra.mxu0 0
    %1009 = vmatprep.subr.bf16.mxu0 0
    %1010 = vmatpush2.bf16.msra.mxu0 0
    %1011 = vmatprep.subr.bf16.mxu0 0
    %1012 = vmatpush2.bf16.msra.mxu0 0
    %1013 = vmatprep.subr.bf16.mxu0 0
    %1014 = vmatpush2.bf16.msra.mxu0 0
    %1015 = vmatprep.subr.bf16.mxu0 0
    %1016 = vmatpush2.bf16.msra.mxu0 0
    %1017 = vmatprep.subr.bf16.mxu0 0
    %1018 = vmatpush2.bf16.msra.mxu0 0
    %1019 = vmatprep.mubr.bf16.mxu0 0
    %1020 = vmatmul.mubr.bf16.gmra.mxu0 %v945
    %v1021 = vpop.f32.mrf.mxu0
    %v1022 = vadd.f32 0.0, %v1021
    %v1023 = vpop.f32.mrf.mxu0
    %v1024 = vadd.f32 0.0, %v1023
    %v1025 = vpop.f32.mrf.mxu0
    %v1026 = vpop.f32.mrf.mxu0
    %1027 = vdwg.mxu0
    %v1028 = vadd.f32 %v941, %v981
    %v1029 = vadd.f32 %v942, %v983
    %v1030 = vadd.f32 %v943, %v1022
    %v1031 = vadd.f32 %v944, %v1024
    %v1032 = vxor.u32 %v1028, 2147483648
    %v1033 = vxor.u32 %v1029, 2147483648
    %v1034 = vmul.f32 %v1032, 1.442695
    %v1035 = vpow.pop %v1034
    %v1036 = vmul.f32 %v1033, 1.442695
    %v1037 = vpow.pop %v1036
    %v1038 = vadd.f32 %v1035, 1.0
    %v1039 = vadd.f32 %v1037, 1.0
    %v1040 = vrcp.pop %v1038
    %v1041 = vmul.f32 1.0, %v1040
    %v1042 = vrcp.pop %v1039
    %v1043 = vmul.f32 1.0, %v1042
    %v1044 = vtanh.pop %v1030
    %v1045 = vxor.u32 %v1031, 2147483648
    %v1046 = vmul.f32 %v1045, 1.442695
    %v1047 = vpow.pop %v1046
    %v1048 = vadd.f32 %v1047, 1.0
    %v1049 = vrcp.pop %v1048
    %v1050 = vmul.f32 1.0, %v1049
    %v1051 = vmul.f32 %v1043, %v906
    %v1052 = vmul.f32 %v1041, %v1044
    %v1053 = vadd.f32 %v1051, %v1052
    %v1054 = vtanh.pop %v1053
    %v1055 = vmul.f32 %v1050, %v1054
    %1056 = vset.pattern.permute.xlu0 5
    %1057 = vperm.xlu0 %1056, %v71
    %v1058 = vpop.permute.xlu0 %1057
    %v1060 = vmul.f32 %v1058, %v81
    %v1061 = vmul.f32 %v1058, %v85
    %v1062 = vmul.f32 %v1058, %v89
    %v1063 = vmul.f32 %v1058, %v93
    %1064 = vset.pattern.permute.xlu0 5
    %1065 = vperm.xlu0 %1064, %v102
    %v1066 = vpop.permute.xlu0 %1065
    %v1068 = vmul.f32 %v1066, %v112
    %v1069 = vmul.f32 %v1066, %v116
    %v1070 = vmul.f32 %v1066, %v120
    %v1071 = vmul.f32 %v1066, %v124
    %v1072 = vadd.f32 %v1060, %v1068
    %v1073 = vadd.f32 %v1061, %v1069
    %v1074 = vadd.f32 %v1062, %v1070
    %v1075 = vadd.f32 %v1063, %v1071
    %1076 = vset.pattern.permute.xlu0 5
    %1077 = vperm.xlu0 %1076, %v137
    %v1078 = vpop.permute.xlu0 %1077
    %v1080 = vmul.f32 %v1078, %v147
    %v1081 = vmul.f32 %v1078, %v151
    %v1082 = vmul.f32 %v1078, %v155
    %v1083 = vmul.f32 %v1078, %v159
    %v1084 = vadd.f32 %v1072, %v1080
    %v1085 = vadd.f32 %v1073, %v1081
    %v1086 = vadd.f32 %v1074, %v1082
    %v1087 = vadd.f32 %v1075, %v1083
    %v1088 = vadd.f32 %v1084, %v176
    %v1089 = vadd.f32 %v1085, %v180
    %v1090 = vadd.f32 %v1086, %v184
    %v1091 = vadd.f32 %v1087, %v188
    %v1092 = vpack.c.bf16 %v1055, %v1055
    %1093 = vmatprep.subr.bf16.mxu0 %v323
    %1094 = vmatpush1.bf16.msra.mxu0 %v322
    %1095 = vmatprep.subr.bf16.mxu0 %v319
    %1096 = vmatpush1.bf16.msra.mxu0 %v318
    %1097 = vmatprep.subr.bf16.mxu0 %v315
    %1098 = vmatpush1.bf16.msra.mxu0 %v314
    %1099 = vmatprep.subr.bf16.mxu0 %v311
    %1100 = vmatpush1.bf16.msra.mxu0 %v310
    %1101 = vmatprep.subr.bf16.mxu0 %v307
    %1102 = vmatpush1.bf16.msra.mxu0 %v306
    %1103 = vmatprep.subr.bf16.mxu0 %v303
    %1104 = vmatpush1.bf16.msra.mxu0 %v302
    %1105 = vmatprep.subr.bf16.mxu0 %v299
    %1106 = vmatpush1.bf16.msra.mxu0 %v298
    %1107 = vmatprep.subr.bf16.mxu0 %v295
    %1108 = vmatpush1.bf16.msra.mxu0 %v294
    %1109 = vmatprep.subr.bf16.mxu0 0
    %1110 = vmatpush2.bf16.msra.mxu0 0
    %1111 = vmatprep.subr.bf16.mxu0 0
    %1112 = vmatpush2.bf16.msra.mxu0 0
    %1113 = vmatprep.subr.bf16.mxu0 0
    %1114 = vmatpush2.bf16.msra.mxu0 0
    %1115 = vmatprep.subr.bf16.mxu0 0
    %1116 = vmatpush2.bf16.msra.mxu0 0
    %1117 = vmatprep.subr.bf16.mxu0 0
    %1118 = vmatpush2.bf16.msra.mxu0 0
    %1119 = vmatprep.subr.bf16.mxu0 0
    %1120 = vmatpush2.bf16.msra.mxu0 0
    %1121 = vmatprep.subr.bf16.mxu0 0
    %1122 = vmatpush2.bf16.msra.mxu0 0
    %1123 = vmatprep.subr.bf16.mxu0 0
    %1124 = vmatpush2.bf16.msra.mxu0 0
    %1125 = vmatprep.mubr.bf16.mxu0 0
    %1126 = vmatmul.mubr.bf16.gmra.mxu0 %v1092
    %v1127 = vpop.f32.mrf.mxu0
    %v1128 = vadd.f32 0.0, %v1127
    %v1129 = vpop.f32.mrf.mxu0
    %v1130 = vadd.f32 0.0, %v1129
    %v1131 = vpop.f32.mrf.mxu0
    %v1132 = vpop.f32.mrf.mxu0
    %1133 = vdwg.mxu0
    %1134 = vmatprep.subr.bf16.mxu0 %v325
    %1135 = vmatpush1.bf16.msra.mxu0 %v324
    %1136 = vmatprep.subr.bf16.mxu0 %v321
    %1137 = vmatpush1.bf16.msra.mxu0 %v320
    %1138 = vmatprep.subr.bf16.mxu0 %v317
    %1139 = vmatpush1.bf16.msra.mxu0 %v316
    %1140 = vmatprep.subr.bf16.mxu0 %v313
    %1141 = vmatpush1.bf16.msra.mxu0 %v312
    %1142 = vmatprep.subr.bf16.mxu0 %v309
    %1143 = vmatpush1.bf16.msra.mxu0 %v308
    %1144 = vmatprep.subr.bf16.mxu0 %v305
    %1145 = vmatpush1.bf16.msra.mxu0 %v304
    %1146 = vmatprep.subr.bf16.mxu0 %v301
    %1147 = vmatpush1.bf16.msra.mxu0 %v300
    %1148 = vmatprep.subr.bf16.mxu0 %v297
    %1149 = vmatpush1.bf16.msra.mxu0 %v296
    %1150 = vmatprep.subr.bf16.mxu0 0
    %1151 = vmatpush2.bf16.msra.mxu0 0
    %1152 = vmatprep.subr.bf16.mxu0 0
    %1153 = vmatpush2.bf16.msra.mxu0 0
    %1154 = vmatprep.subr.bf16.mxu0 0
    %1155 = vmatpush2.bf16.msra.mxu0 0
    %1156 = vmatprep.subr.bf16.mxu0 0
    %1157 = vmatpush2.bf16.msra.mxu0 0
    %1158 = vmatprep.subr.bf16.mxu0 0
    %1159 = vmatpush2.bf16.msra.mxu0 0
    %1160 = vmatprep.subr.bf16.mxu0 0
    %1161 = vmatpush2.bf16.msra.mxu0 0
    %1162 = vmatprep.subr.bf16.mxu0 0
    %1163 = vmatpush2.bf16.msra.mxu0 0
    %1164 = vmatprep.subr.bf16.mxu0 0
    %1165 = vmatpush2.bf16.msra.mxu0 0
    %1166 = vmatprep.mubr.bf16.mxu0 0
    %1167 = vmatmul.mubr.bf16.gmra.mxu0 %v1092
    %v1168 = vpop.f32.mrf.mxu0
    %v1169 = vadd.f32 0.0, %v1168
    %v1170 = vpop.f32.mrf.mxu0
    %v1171 = vadd.f32 0.0, %v1170
    %v1172 = vpop.f32.mrf.mxu0
    %v1173 = vpop.f32.mrf.mxu0
    %1174 = vdwg.mxu0
    %v1175 = vadd.f32 %v1088, %v1128
    %v1176 = vadd.f32 %v1089, %v1130
    %v1177 = vadd.f32 %v1090, %v1169
    %v1178 = vadd.f32 %v1091, %v1171
    %v1179 = vxor.u32 %v1175, 2147483648
    %v1180 = vxor.u32 %v1176, 2147483648
    %v1181 = vmul.f32 %v1179, 1.442695
    %v1182 = vpow.pop %v1181
    %v1183 = vmul.f32 %v1180, 1.442695
    %v1184 = vpow.pop %v1183
    %v1185 = vadd.f32 %v1182, 1.0
    %v1186 = vadd.f32 %v1184, 1.0
    %v1187 = vrcp.pop %v1185
    %v1188 = vmul.f32 1.0, %v1187
    %v1189 = vrcp.pop %v1186
    %v1190 = vmul.f32 1.0, %v1189
    %v1191 = vtanh.pop %v1177
    %v1192 = vxor.u32 %v1178, 2147483648
    %v1193 = vmul.f32 %v1192, 1.442695
    %v1194 = vpow.pop %v1193
    %v1195 = vadd.f32 %v1194, 1.0
    %v1196 = vrcp.pop %v1195
    %v1197 = vmul.f32 1.0, %v1196
    %v1198 = vmul.f32 %v1190, %v1053
    %v1199 = vmul.f32 %v1188, %v1191
    %v1200 = vadd.f32 %v1198, %v1199
    %v1201 = vtanh.pop %v1200
    %v1202 = vmul.f32 %v1197, %v1201
    %1203 = vset.pattern.permute.xlu0 6
    %1204 = vperm.xlu0 %1203, %v71
    %v1205 = vpop.permute.xlu0 %1204
    %v1207 = vmul.f32 %v1205, %v81
    %v1208 = vmul.f32 %v1205, %v85
    %v1209 = vmul.f32 %v1205, %v89
    %v1210 = vmul.f32 %v1205, %v93
    %1211 = vset.pattern.permute.xlu0 6
    %1212 = vperm.xlu0 %1211, %v102
    %v1213 = vpop.permute.xlu0 %1212
    %v1215 = vmul.f32 %v1213, %v112
    %v1216 = vmul.f32 %v1213, %v116
    %v1217 = vmul.f32 %v1213, %v120
    %v1218 = vmul.f32 %v1213, %v124
    %v1219 = vadd.f32 %v1207, %v1215
    %v1220 = vadd.f32 %v1208, %v1216
    %v1221 = vadd.f32 %v1209, %v1217
    %v1222 = vadd.f32 %v1210, %v1218
    %1223 = vset.pattern.permute.xlu0 6
    %1224 = vperm.xlu0 %1223, %v137
    %v1225 = vpop.permute.xlu0 %1224
    %v1227 = vmul.f32 %v1225, %v147
    %v1228 = vmul.f32 %v1225, %v151
    %v1229 = vmul.f32 %v1225, %v155
    %v1230 = vmul.f32 %v1225, %v159
    %v1231 = vadd.f32 %v1219, %v1227
    %v1232 = vadd.f32 %v1220, %v1228
    %v1233 = vadd.f32 %v1221, %v1229
    %v1234 = vadd.f32 %v1222, %v1230
    %v1235 = vadd.f32 %v1231, %v176
    %v1236 = vadd.f32 %v1232, %v180
    %v1237 = vadd.f32 %v1233, %v184
    %v1238 = vadd.f32 %v1234, %v188
    %v1239 = vpack.c.bf16 %v1202, %v1202
    %1240 = vmatprep.subr.bf16.mxu0 %v323
    %1241 = vmatpush1.bf16.msra.mxu0 %v322
    %1242 = vmatprep.subr.bf16.mxu0 %v319
    %1243 = vmatpush1.bf16.msra.mxu0 %v318
    %1244 = vmatprep.subr.bf16.mxu0 %v315
    %1245 = vmatpush1.bf16.msra.mxu0 %v314
    %1246 = vmatprep.subr.bf16.mxu0 %v311
    %1247 = vmatpush1.bf16.msra.mxu0 %v310
    %1248 = vmatprep.subr.bf16.mxu0 %v307
    %1249 = vmatpush1.bf16.msra.mxu0 %v306
    %1250 = vmatprep.subr.bf16.mxu0 %v303
    %1251 = vmatpush1.bf16.msra.mxu0 %v302
    %1252 = vmatprep.subr.bf16.mxu0 %v299
    %1253 = vmatpush1.bf16.msra.mxu0 %v298
    %1254 = vmatprep.subr.bf16.mxu0 %v295
    %1255 = vmatpush1.bf16.msra.mxu0 %v294
    %1256 = vmatprep.subr.bf16.mxu0 0
    %1257 = vmatpush2.bf16.msra.mxu0 0
    %1258 = vmatprep.subr.bf16.mxu0 0
    %1259 = vmatpush2.bf16.msra.mxu0 0
    %1260 = vmatprep.subr.bf16.mxu0 0
    %1261 = vmatpush2.bf16.msra.mxu0 0
    %1262 = vmatprep.subr.bf16.mxu0 0
    %1263 = vmatpush2.bf16.msra.mxu0 0
    %1264 = vmatprep.subr.bf16.mxu0 0
    %1265 = vmatpush2.bf16.msra.mxu0 0
    %1266 = vmatprep.subr.bf16.mxu0 0
    %1267 = vmatpush2.bf16.msra.mxu0 0
    %1268 = vmatprep.subr.bf16.mxu0 0
    %1269 = vmatpush2.bf16.msra.mxu0 0
    %1270 = vmatprep.subr.bf16.mxu0 0
    %1271 = vmatpush2.bf16.msra.mxu0 0
    %1272 = vmatprep.mubr.bf16.mxu0 0
    %1273 = vmatmul.mubr.bf16.gmra.mxu0 %v1239
    %v1274 = vpop.f32.mrf.mxu0
    %v1275 = vadd.f32 0.0, %v1274
    %v1276 = vpop.f32.mrf.mxu0
    %v1277 = vadd.f32 0.0, %v1276
    %v1278 = vpop.f32.mrf.mxu0
    %v1279 = vpop.f32.mrf.mxu0
    %1280 = vdwg.mxu0
    %1281 = vmatprep.subr.bf16.mxu0 %v325
    %1282 = vmatpush1.bf16.msra.mxu0 %v324
    %1283 = vmatprep.subr.bf16.mxu0 %v321
    %1284 = vmatpush1.bf16.msra.mxu0 %v320
    %1285 = vmatprep.subr.bf16.mxu0 %v317
    %1286 = vmatpush1.bf16.msra.mxu0 %v316
    %1287 = vmatprep.subr.bf16.mxu0 %v313
    %1288 = vmatpush1.bf16.msra.mxu0 %v312
    %1289 = vmatprep.subr.bf16.mxu0 %v309
    %1290 = vmatpush1.bf16.msra.mxu0 %v308
    %1291 = vmatprep.subr.bf16.mxu0 %v305
    %1292 = vmatpush1.bf16.msra.mxu0 %v304
    %1293 = vmatprep.subr.bf16.mxu0 %v301
    %1294 = vmatpush1.bf16.msra.mxu0 %v300
    %1295 = vmatprep.subr.bf16.mxu0 %v297
    %1296 = vmatpush1.bf16.msra.mxu0 %v296
    %1297 = vmatprep.subr.bf16.mxu0 0
    %1298 = vmatpush2.bf16.msra.mxu0 0
    %1299 = vmatprep.subr.bf16.mxu0 0
    %1300 = vmatpush2.bf16.msra.mxu0 0
    %1301 = vmatprep.subr.bf16.mxu0 0
    %1302 = vmatpush2.bf16.msra.mxu0 0
    %1303 = vmatprep.subr.bf16.mxu0 0
    %1304 = vmatpush2.bf16.msra.mxu0 0
    %1305 = vmatprep.subr.bf16.mxu0 0
    %1306 = vmatpush2.bf16.msra.mxu0 0
    %1307 = vmatprep.subr.bf16.mxu0 0
    %1308 = vmatpush2.bf16.msra.mxu0 0
    %1309 = vmatprep.subr.bf16.mxu0 0
    %1310 = vmatpush2.bf16.msra.mxu0 0
    %1311 = vmatprep.subr.bf16.mxu0 0
    %1312 = vmatpush2.bf16.msra.mxu0 0
    %1313 = vmatprep.mubr.bf16.mxu0 0
    %1314 = vmatmul.mubr.bf16.gmra.mxu0 %v1239
    %v1315 = vpop.f32.mrf.mxu0
    %v1316 = vadd.f32 0.0, %v1315
    %v1317 = vpop.f32.mrf.mxu0
    %v1318 = vadd.f32 0.0, %v1317
    %v1319 = vpop.f32.mrf.mxu0
    %v1320 = vpop.f32.mrf.mxu0
    %1321 = vdwg.mxu0
    %v1322 = vadd.f32 %v1235, %v1275
    %v1323 = vadd.f32 %v1236, %v1277
    %v1324 = vadd.f32 %v1237, %v1316
    %v1325 = vadd.f32 %v1238, %v1318
    %v1326 = vxor.u32 %v1322, 2147483648
    %v1327 = vxor.u32 %v1323, 2147483648
    %v1328 = vmul.f32 %v1326, 1.442695
    %v1329 = vpow.pop %v1328
    %v1330 = vmul.f32 %v1327, 1.442695
    %v1331 = vpow.pop %v1330
    %v1332 = vadd.f32 %v1329, 1.0
    %v1333 = vadd.f32 %v1331, 1.0
    %v1334 = vrcp.pop %v1332
    %v1335 = vmul.f32 1.0, %v1334
    %v1336 = vrcp.pop %v1333
    %v1337 = vmul.f32 1.0, %v1336
    %v1338 = vtanh.pop %v1324
    %v1339 = vxor.u32 %v1325, 2147483648
    %v1340 = vmul.f32 %v1339, 1.442695
    %v1341 = vpow.pop %v1340
    %v1342 = vadd.f32 %v1341, 1.0
    %v1343 = vrcp.pop %v1342
    %v1344 = vmul.f32 1.0, %v1343
    %v1345 = vmul.f32 %v1337, %v1200
    %v1346 = vmul.f32 %v1335, %v1338
    %v1347 = vadd.f32 %v1345, %v1346
    %v1348 = vtanh.pop %v1347
    %v1349 = vmul.f32 %v1344, %v1348
    %1350 = vset.pattern.permute.xlu0 7
    %1351 = vperm.xlu0 %1350, %v71
    %v1352 = vpop.permute.xlu0 %1351
    %v1354 = vmul.f32 %v1352, %v81
    %v1355 = vmul.f32 %v1352, %v85
    %v1356 = vmul.f32 %v1352, %v89
    %v1357 = vmul.f32 %v1352, %v93
    %1358 = vset.pattern.permute.xlu0 7
    %1359 = vperm.xlu0 %1358, %v102
    %v1360 = vpop.permute.xlu0 %1359
    %v1362 = vmul.f32 %v1360, %v112
    %v1363 = vmul.f32 %v1360, %v116
    %v1364 = vmul.f32 %v1360, %v120
    %v1365 = vmul.f32 %v1360, %v124
    %v1366 = vadd.f32 %v1354, %v1362
    %v1367 = vadd.f32 %v1355, %v1363
    %v1368 = vadd.f32 %v1356, %v1364
    %v1369 = vadd.f32 %v1357, %v1365
    %1370 = vset.pattern.permute.xlu0 7
    %1371 = vperm.xlu0 %1370, %v137
    %v1372 = vpop.permute.xlu0 %1371
    %v1374 = vmul.f32 %v1372, %v147
    %v1375 = vmul.f32 %v1372, %v151
    %v1376 = vmul.f32 %v1372, %v155
    %v1377 = vmul.f32 %v1372, %v159
    %v1378 = vadd.f32 %v1366, %v1374
    %v1379 = vadd.f32 %v1367, %v1375
    %v1380 = vadd.f32 %v1368, %v1376
    %v1381 = vadd.f32 %v1369, %v1377
    %v1382 = vadd.f32 %v1378, %v176
    %v1383 = vadd.f32 %v1379, %v180
    %v1384 = vadd.f32 %v1380, %v184
    %v1385 = vadd.f32 %v1381, %v188
    %v1386 = vpack.c.bf16 %v1349, %v1349
    %1387 = vmatprep.subr.bf16.mxu0 %v323
    %1388 = vmatpush1.bf16.msra.mxu0 %v322
    %1389 = vmatprep.subr.bf16.mxu0 %v319
    %1390 = vmatpush1.bf16.msra.mxu0 %v318
    %1391 = vmatprep.subr.bf16.mxu0 %v315
    %1392 = vmatpush1.bf16.msra.mxu0 %v314
    %1393 = vmatprep.subr.bf16.mxu0 %v311
    %1394 = vmatpush1.bf16.msra.mxu0 %v310
    %1395 = vmatprep.subr.bf16.mxu0 %v307
    %1396 = vmatpush1.bf16.msra.mxu0 %v306
    %1397 = vmatprep.subr.bf16.mxu0 %v303
    %1398 = vmatpush1.bf16.msra.mxu0 %v302
    %1399 = vmatprep.subr.bf16.mxu0 %v299
    %1400 = vmatpush1.bf16.msra.mxu0 %v298
    %1401 = vmatprep.subr.bf16.mxu0 %v295
    %1402 = vmatpush1.bf16.msra.mxu0 %v294
    %1403 = vmatprep.subr.bf16.mxu0 0
    %1404 = vmatpush2.bf16.msra.mxu0 0
    %1405 = vmatprep.subr.bf16.mxu0 0
    %1406 = vmatpush2.bf16.msra.mxu0 0
    %1407 = vmatprep.subr.bf16.mxu0 0
    %1408 = vmatpush2.bf16.msra.mxu0 0
    %1409 = vmatprep.subr.bf16.mxu0 0
    %1410 = vmatpush2.bf16.msra.mxu0 0
    %1411 = vmatprep.subr.bf16.mxu0 0
    %1412 = vmatpush2.bf16.msra.mxu0 0
    %1413 = vmatprep.subr.bf16.mxu0 0
    %1414 = vmatpush2.bf16.msra.mxu0 0
    %1415 = vmatprep.subr.bf16.mxu0 0
    %1416 = vmatpush2.bf16.msra.mxu0 0
    %1417 = vmatprep.subr.bf16.mxu0 0
    %1418 = vmatpush2.bf16.msra.mxu0 0
    %1419 = vmatprep.mubr.bf16.mxu0 0
    %1420 = vmatmul.mubr.bf16.gmra.mxu0 %v1386
    %v1421 = vpop.f32.mrf.mxu0
    %v1422 = vadd.f32 0.0, %v1421
    %v1423 = vpop.f32.mrf.mxu0
    %v1424 = vadd.f32 0.0, %v1423
    %v1425 = vpop.f32.mrf.mxu0
    %v1426 = vpop.f32.mrf.mxu0
    %1427 = vdwg.mxu0
    %1428 = vmatprep.subr.bf16.mxu0 %v325
    %1429 = vmatpush1.bf16.msra.mxu0 %v324
    %1430 = vmatprep.subr.bf16.mxu0 %v321
    %1431 = vmatpush1.bf16.msra.mxu0 %v320
    %1432 = vmatprep.subr.bf16.mxu0 %v317
    %1433 = vmatpush1.bf16.msra.mxu0 %v316
    %1434 = vmatprep.subr.bf16.mxu0 %v313
    %1435 = vmatpush1.bf16.msra.mxu0 %v312
    %1436 = vmatprep.subr.bf16.mxu0 %v309
    %1437 = vmatpush1.bf16.msra.mxu0 %v308
    %1438 = vmatprep.subr.bf16.mxu0 %v305
    %1439 = vmatpush1.bf16.msra.mxu0 %v304
    %1440 = vmatprep.subr.bf16.mxu0 %v301
    %1441 = vmatpush1.bf16.msra.mxu0 %v300
    %1442 = vmatprep.subr.bf16.mxu0 %v297
    %1443 = vmatpush1.bf16.msra.mxu0 %v296
    %1444 = vmatprep.subr.bf16.mxu0 0
    %1445 = vmatpush2.bf16.msra.mxu0 0
    %1446 = vmatprep.subr.bf16.mxu0 0
    %1447 = vmatpush2.bf16.msra.mxu0 0
    %1448 = vmatprep.subr.bf16.mxu0 0
    %1449 = vmatpush2.bf16.msra.mxu0 0
    %1450 = vmatprep.subr.bf16.mxu0 0
    %1451 = vmatpush2.bf16.msra.mxu0 0
    %1452 = vmatprep.subr.bf16.mxu0 0
    %1453 = vmatpush2.bf16.msra.mxu0 0
    %1454 = vmatprep.subr.bf16.mxu0 0
    %1455 = vmatpush2.bf16.msra.mxu0 0
    %1456 = vmatprep.subr.bf16.mxu0 0
    %1457 = vmatpush2.bf16.msra.mxu0 0
    %1458 = vmatprep.subr.bf16.mxu0 0
    %1459 = vmatpush2.bf16.msra.mxu0 0
    %1460 = vmatprep.mubr.bf16.mxu0 0
    %1461 = vmatmul.mubr.bf16.gmra.mxu0 %v1386
    %v1462 = vpop.f32.mrf.mxu0
    %v1463 = vadd.f32 0.0, %v1462
    %v1464 = vpop.f32.mrf.mxu0
    %v1465 = vadd.f32 0.0, %v1464
    %v1466 = vpop.f32.mrf.mxu0
    %v1467 = vpop.f32.mrf.mxu0
    %1468 = vdwg.mxu0
    %v1469 = vadd.f32 %v1382, %v1422
    %v1470 = vadd.f32 %v1383, %v1424
    %v1471 = vadd.f32 %v1384, %v1463
    %v1472 = vadd.f32 %v1385, %v1465
    %v1473 = vxor.u32 %v1469, 2147483648
    %v1474 = vxor.u32 %v1470, 2147483648
    %v1475 = vmul.f32 %v1473, 1.442695
    %v1476 = vpow.pop %v1475
    %v1477 = vmul.f32 %v1474, 1.442695
    %v1478 = vpow.pop %v1477
    %v1479 = vadd.f32 %v1476, 1.0
    %v1480 = vadd.f32 %v1478, 1.0
    %v1481 = vrcp.pop %v1479
    %v1482 = vmul.f32 1.0, %v1481
    %v1483 = vrcp.pop %v1480
    %v1484 = vmul.f32 1.0, %v1483
    %v1485 = vtanh.pop %v1471
    %v1486 = vxor.u32 %v1472, 2147483648
    %v1487 = vmul.f32 %v1486, 1.442695
    %v1488 = vpow.pop %v1487
    %v1489 = vadd.f32 %v1488, 1.0
    %v1490 = vrcp.pop %v1489
    %v1491 = vmul.f32 1.0, %v1490
    %v1492 = vmul.f32 %v1484, %v1347
    %v1493 = vmul.f32 %v1482, %v1485
    %v1494 = vadd.f32 %v1492, %v1493
    %v1495 = vtanh.pop %v1494
    %v1496 = vmul.f32 %v1491, %v1495
    %1497 = vst [vmem:[#allocation2] sm:$0xff] %v1496
    // Predicated region
    $region34: #{temperature_model_forward.1} parent=1 // pred_check
      _
    $region35: #{temperature_model_forward.1} parent=1 // pred_check_branch
      %1499 = sbr.rel (0) target = $region37
    $region36: #{temperature_model_forward.1} parent=1 // pred_region
      %s1501 = ssub.s32 128, 128
      %1502 = vsyncadd [#allocation3], %s1501
      %s1504 = sshll.u32 [#allocation2], 4
      %s1505 = int_to_ptr.vmem [resolvable:$true] %s1504
      %1507 = dma.vmem_to_hbm [thread:$0]  %s1505, 128, %s8, [#allocation3]
    $region37: #{temperature_model_forward.1} parent=1 // pred_fallthru
      _
    // Predicated region
    $region38: #{temperature_model_forward.1} parent=1 // pred_check
      _
    $region39: #{temperature_model_forward.1} parent=1 // pred_check_branch
      %1509 = sbr.rel (0) target = $region41
    $region40: #{temperature_model_forward.1} parent=1 // pred_region
      %1510 = dma.done [#allocation3], 128
    $region41: #{temperature_model_forward.1} parent=1 // pred_fallthru
      _
    %1511 = vsyncpa [#allocation3], 1

</llo_original>
